<compile_context>
chip_gen: v5e
topology: v5e:2x2
jax: 0.10.0
libtpu: 0.0.40
codegen_flags: <defaults>
</compile_context>

<pallas_src>
import functools

import jax
import jax.numpy as jnp
from jax import lax
from jax.experimental import pallas as pl
from jax.experimental.pallas import tpu as pltpu


def _loss_kernel(fi_ref, fj_ref, bi_ref, bj_ref, si_ref, sj_ref, o_ref, acc_ref, *,
                 margin, n_valid, tile, apply_token_mask, binary_boundary):
    i = pl.program_id(1)          # row-tile index (parallel)
    j = pl.program_id(2)          # col-tile index (sequential reduction, last)
    num_i = pl.num_programs(1)
    num_j = pl.num_programs(2)

    # reset the per-(batch-block, row-tile) accumulator at the start of the j loop
    @pl.when(j == 0)
    def _():
        acc_ref[...] = jnp.zeros_like(acc_ref)

    # dist / pos / hinge are all symmetric in (i, j): compute only the upper
    # triangle of tiles; off-diagonal tiles count twice.
    @pl.when(j >= i)
    def _():
        fi = fi_ref[...]                              # (TB, TI, D), native dtype
        fj = fj_ref[...]                              # (TB, TJ, D), native dtype

        # fold -2 into the cheap (TB*TJ*D) column operand, not the (TB*TI*TJ)
        # panel; batched contraction on D with f32 accumulation on the MXU.
        gram = lax.dot_general(
            fi, fj * jnp.asarray(-2.0, dtype=fj.dtype),
            dimension_numbers=(((2,), (2,)), ((0,), (0,))),
            preferred_element_type=jnp.float32)        # (TB, TI, TJ)

        # squared norms precomputed outside the kernel (f32)
        d2 = si_ref[...][:, :, None] + sj_ref[...][:, None, :] + gram
        dist = jnp.sqrt(jnp.maximum(d2, 0.0))          # (TB, TI, TJ)
        hinge = jnp.maximum(margin - dist, 0.0)

        if binary_boundary:
            # {0,1} boundary maps: 2 panel ops (AND + select)
            mask = jnp.logical_and(bi_ref[...][:, :, None] > 0,
                                   bj_ref[...][:, None, :] > 0)
            contrib = jnp.where(mask, dist, hinge)
        else:
            # soft boundary maps:
            # pos*dist + (1-pos)*hinge == hinge + pos*(dist - hinge)
            pos = (bi_ref[...].astype(jnp.float32)[:, :, None]
                   * bj_ref[...].astype(jnp.float32)[:, None, :])
            contrib = hinge + pos * (dist - hinge)

        weight = jnp.where(i == j, 1.0, 2.0).astype(jnp.float32)

        def _accum(c):
            # lane (XLU) reduce per step; sublane reduce deferred to last step
            acc_ref[...] += weight * jnp.sum(c, axis=2)

        if apply_token_mask:        # static: only emitted when N was padded
            is_edge = jnp.logical_or(i == num_i - 1, j == num_j - 1)

            @pl.when(jnp.logical_not(is_edge))
            def _():
                _accum(contrib)

            @pl.when(is_edge)       # padded tokens only live in edge tiles
            def _():
                row_ids = i * tile + lax.broadcasted_iota(jnp.int32, (tile, tile), 0)
                col_ids = j * tile + lax.broadcasted_iota(jnp.int32, (tile, tile), 1)
                valid = jnp.logical_and(row_ids < n_valid, col_ids < n_valid)
                _accum(jnp.where(valid[None, :, :], contrib, 0.0))
        else:
            _accum(contrib)

    # single write of the (TB, 1) partial at the end of the j loop
    @pl.when(j == num_j - 1)
    def _():
        o_ref[...] = jnp.sum(acc_ref[...], axis=1, keepdims=True)[None]


def boundary_aware_contrastive_loss(features, boundary_map, margin=1.0, *,
                                    assume_binary_boundary=False):
    B, N, D = features.shape
    assert boundary_map.shape == (B, N)

    # batch blocking: no padding for B <= 8 (TB == B); blocks of 8 otherwise
    if B <= 8:
        TB = B
        B_pad = B
    else:
        TB = 8
        B_pad = ((B + 7) // 8) * 8

    N_pad = ((N + 127) // 128) * 128              # lane-aligned token count
    if N_pad <= 256:
        TILE = N_pad                              # v7x-safe: keep TILE <= 256
    elif N_pad % 256 == 0:
        TILE = 256
    else:
        TILE = 128

    if B_pad != B or N_pad != N:
        features = jnp.pad(features, ((0, B_pad - B), (0, N_pad - N), (0, 0)))
        boundary_map = jnp.pad(boundary_map, ((0, B_pad - B), (0, N_pad - N)))

    # per-token squared norms, computed once outside the kernel (f32)
    sq_norm = jnp.sum(jnp.square(features.astype(jnp.float32)), axis=-1)   # (B_pad, N_pad)

    num_tiles = N_pad // TILE
    grid = (B_pad // TB, num_tiles, num_tiles)

    kernel = functools.partial(
        _loss_kernel,
        margin=float(margin),
        n_valid=N,
        tile=TILE,
        apply_token_mask=(N_pad != N),
        binary_boundary=bool(assume_binary_boundary),
    )

    partials = pl.pallas_call(
        kernel,
        out_shape=jax.ShapeDtypeStruct((num_tiles, B_pad, 1), jnp.float32),
        grid_spec=pltpu.PrefetchScalarGridSpec(
            num_scalar_prefetch=0,
            grid=grid,
            in_specs=[
                pl.BlockSpec((TB, TILE, D), lambda b, i, j: (b, i, 0)),   # row features
                pl.BlockSpec((TB, TILE, D), lambda b, i, j: (b, j, 0)),   # col features
                pl.BlockSpec((TB, TILE), lambda b, i, j: (b, i)),         # row boundary
                pl.BlockSpec((TB, TILE), lambda b, i, j: (b, j)),         # col boundary
                pl.BlockSpec((TB, TILE), lambda b, i, j: (b, i)),         # row sq-norms
                pl.BlockSpec((TB, TILE), lambda b, i, j: (b, j)),         # col sq-norms
            ],
            out_specs=pl.BlockSpec((1, TB, 1), lambda b, i, j: (i, b, 0)),
            scratch_shapes=[pltpu.VMEM((TB, TILE), jnp.float32)],
        ),
        compiler_params=pltpu.CompilerParams(
            # batch-block and row-tile axes shard across TensorCores (v7x);
            # j is the accumulated reduction axis and stays last.
            dimension_semantics=("parallel", "parallel", "arbitrary"),
            # v7x-safe (64 MiB physical); on v5e/v6e (128 MiB) TILE=512 / TB=16
            # with ~96 MiB would amortize per-step overhead even further.
            vmem_limit_bytes=48 * 1024 * 1024,
        ),
    )(features, features, boundary_map, boundary_map, sq_norm, sq_norm)

    total = jnp.sum(partials[:, :B, 0])
    return total / float(B * N * N)


def _reference(features, boundary_map, margin=1.0):
    # pure-JAX reference of the torch forward for sanity checking
    diff = features[:, :, None, :] - features[:, None, :, :]
    dist = jnp.sqrt(jnp.maximum(jnp.sum(diff * diff, -1), 0.0))
    pos = boundary_map[:, None, :] * boundary_map[:, :, None]
    neg = 1.0 - pos
    pos_loss = jnp.mean(pos * dist)
    neg_loss = jnp.mean(neg * jnp.maximum(margin - dist, 0.0))
    return pos_loss + neg_loss


if __name__ == "__main__":
    B, N, D = 2, 128, 32
    key = jax.random.PRNGKey(0)
    k1, k2 = jax.random.split(key)
    features = jax.random.normal(k1, (B, N, D), dtype=jnp.float32)
    boundary_map = (jax.random.uniform(k2, (B, N)) > 0.5).astype(jnp.float32)

    ref = _reference(features, boundary_map, margin=1.0)

    # default path (exact semantics, supports soft boundary maps)
    loss = boundary_aware_contrastive_loss(features, boundary_map, margin=1.0)
    loss = jax.block_until_ready(loss)
    assert jnp.allclose(loss, ref, rtol=1e-4, atol=1e-4), (loss, ref)

    # binary-boundary fast path (valid here because boundary_map is {0,1})
    loss_bin = boundary_aware_contrastive_loss(
        features, boundary_map, margin=1.0, assume_binary_boundary=True)
    loss_bin = jax.block_until_ready(loss_bin)
    assert jnp.allclose(loss_bin, ref, rtol=1e-4, atol=1e-4), (loss_bin, ref)

    print("KERNEL_OK")
</pallas_src>

<mosaic_0001>
module attributes {stable_mosaic.version = 11 : i64} {
  func.func @_loss_kernel(%arg0: i32, %arg1: i32, %arg2: i32, %arg3: memref<2x128x32xf32, #tpu.memory_space<vmem>>, %arg4: memref<2x128x32xf32, #tpu.memory_space<vmem>>, %arg5: memref<2x128xf32, #tpu.memory_space<vmem>>, %arg6: memref<2x128xf32, #tpu.memory_space<vmem>>, %arg7: memref<2x128xf32, #tpu.memory_space<vmem>>, %arg8: memref<2x128xf32, #tpu.memory_space<vmem>>, %arg9: memref<1x2x1xf32, #tpu.memory_space<vmem>>, %arg10: memref<2x128xf32, #tpu.memory_space<vmem>>) attributes {dimension_semantics = [#tpu.dimension_semantics<parallel>, #tpu.dimension_semantics<parallel>, #tpu.dimension_semantics<arbitrary>], iteration_bounds = array<i64: 1, 1, 1>, scalar_prefetch = 0 : i64, scratch_operands = 1 : i64, tpu.core_type = #tpu.core_type<tc>, window_params = [{transform_indices = @transform_0, window_bounds = array<i64: 2, 128, 32>}, {transform_indices = @transform_1, window_bounds = array<i64: 2, 128, 32>}, {transform_indices = @transform_2, window_bounds = array<i64: 2, 128>}, {transform_indices = @transform_3, window_bounds = array<i64: 2, 128>}, {transform_indices = @transform_4, window_bounds = array<i64: 2, 128>}, {transform_indices = @transform_5, window_bounds = array<i64: 2, 128>}, {transform_indices = @transform_6, window_bounds = array<i64: 1, 2, 1>}]} {
    %c0_i32 = arith.constant 0 : i32
    %0 = arith.cmpi eq, %arg2, %c0_i32 : i32
    %1 = arith.extui %0 : i1 to i32
    %c0_i32_0 = arith.constant 0 : i32
    %2 = arith.cmpi ne, %1, %c0_i32_0 : i32
    scf.if %2 {
      %cst = arith.constant 0.000000e+00 : f32
      %9 = vector.broadcast %cst : f32 to vector<2x128xf32>
      %c0 = arith.constant 0 : index
      %c0_4 = arith.constant 0 : index
      %10 = vector.load %arg10[%c0, %c0_4] : memref<2x128xf32, #tpu.memory_space<vmem>>, vector<2x128xf32>
      tpu.vector_store %arg10[%c0, %c0_4], %9 {strides = array<i32>} : memref<2x128xf32, #tpu.memory_space<vmem>>, vector<2x128xf32>,
    } else {
    }
    %3 = arith.cmpi sge, %arg2, %arg1 : i32
    %4 = arith.extui %3 : i1 to i32
    %c0_i32_1 = arith.constant 0 : i32
    %5 = arith.cmpi ne, %4, %c0_i32_1 : i32
    scf.if %5 {
      %c0 = arith.constant 0 : index
      %c0_4 = arith.constant 0 : index
      %c0_5 = arith.constant 0 : index
      %9 = vector.load %arg3[%c0, %c0_4, %c0_5] : memref<2x128x32xf32, #tpu.memory_space<vmem>>, vector<2x128x32xf32>
      %c0_6 = arith.constant 0 : index
      %c0_7 = arith.constant 0 : index
      %c0_8 = arith.constant 0 : index
      %10 = vector.load %arg4[%c0_6, %c0_7, %c0_8] : memref<2x128x32xf32, #tpu.memory_space<vmem>>, vector<2x128x32xf32>
      %cst = arith.constant -2.000000e+00 : f32
      %11 = vector.broadcast %cst : f32 to vector<2x128x32xf32>
      %12 = arith.mulf %10, %11 : vector<2x128x32xf32>
      %cst_9 = arith.constant dense<0.000000e+00> : vector<2x128x128xf32>
      %13 = tpu.matmul %9, %12, %cst_9 {dimension_numbers = #tpu.dot_dimension_numbers<[2], [2], [1], [1], [0, 0, 0, 1, 1, 1], [0], [0]>} : vector<2x128x32xf32>, vector<2x128x32xf32>, vector<2x128x128xf32> -> vector<2x128x128xf32>
      %c0_10 = arith.constant 0 : index
      %c0_11 = arith.constant 0 : index
      %14 = vector.load %arg7[%c0_10, %c0_11] : memref<2x128xf32, #tpu.memory_space<vmem>>, vector<2x128xf32>
      %15 = vector.shape_cast %14 : vector<2x128xf32> to vector<2x128x1xf32>
      %c0_12 = arith.constant 0 : index
      %c0_13 = arith.constant 0 : index
      %16 = vector.load %arg8[%c0_12, %c0_13] : memref<2x128xf32, #tpu.memory_space<vmem>>, vector<2x128xf32>
      %17 = vector.shape_cast %16 : vector<2x128xf32> to vector<2x1x128xf32>
      %18 = vector.broadcast %15 : vector<2x128x1xf32> to vector<2x128x128xf32>
      %19 = vector.broadcast %17 : vector<2x1x128xf32> to vector<2x128x128xf32>
      %20 = arith.addf %18, %19 : vector<2x128x128xf32>
      %21 = arith.addf %20, %13 : vector<2x128x128xf32>
      %cst_14 = arith.constant 0.000000e+00 : f32
      %22 = vector.broadcast %cst_14 : f32 to vector<2x128x128xf32>
      %23 = arith.maximumf %21, %22 : vector<2x128x128xf32>
      %24 = math.sqrt %23 : vector<2x128x128xf32>
      %cst_15 = arith.constant 1.000000e+00 : f32
      %25 = vector.broadcast %cst_15 : f32 to vector<2x128x128xf32>
      %26 = arith.subf %25, %24 : vector<2x128x128xf32>
      %cst_16 = arith.constant 0.000000e+00 : f32
      %27 = vector.broadcast %cst_16 : f32 to vector<2x128x128xf32>
      %28 = arith.maximumf %26, %27 : vector<2x128x128xf32>
      %c0_17 = arith.constant 0 : index
      %c0_18 = arith.constant 0 : index
      %29 = vector.load %arg5[%c0_17, %c0_18] : memref<2x128xf32, #tpu.memory_space<vmem>>, vector<2x128xf32>
      %30 = vector.shape_cast %29 : vector<2x128xf32> to vector<2x128x1xf32>
      %c0_19 = arith.constant 0 : index
      %c0_20 = arith.constant 0 : index
      %31 = vector.load %arg6[%c0_19, %c0_20] : memref<2x128xf32, #tpu.memory_space<vmem>>, vector<2x128xf32>
      %32 = vector.shape_cast %31 : vector<2x128xf32> to vector<2x1x128xf32>
      %33 = vector.broadcast %30 : vector<2x128x1xf32> to vector<2x128x128xf32>
      %34 = vector.broadcast %32 : vector<2x1x128xf32> to vector<2x128x128xf32>
      %35 = arith.mulf %33, %34 : vector<2x128x128xf32>
      %36 = arith.subf %24, %28 : vector<2x128x128xf32>
      %37 = arith.mulf %35, %36 : vector<2x128x128xf32>
      %38 = arith.addf %28, %37 : vector<2x128x128xf32>
      %39 = arith.cmpi eq, %arg1, %arg2 : i32
      %cst_21 = arith.constant 1.000000e+00 : f32
      %cst_22 = arith.constant 2.000000e+00 : f32
      %40 = arith.select %39, %cst_21, %cst_22 : f32
      %c0_23 = arith.constant 0 : index
      %c0_24 = arith.constant 0 : index
      %41 = vector.load %arg10[%c0_23, %c0_24] : memref<2x128xf32, #tpu.memory_space<vmem>>, vector<2x128xf32>
      %cst_25 = arith.constant dense<0.000000e+00> : vector<2x128xf32>
      %42 = vector.multi_reduction <add>, %38, %cst_25 [2] : vector<2x128x128xf32> to vector<2x128xf32>
      %43 = vector.broadcast %40 : f32 to vector<2x128xf32>
      %44 = arith.mulf %43, %42 : vector<2x128xf32>
      %45 = arith.addf %41, %44 : vector<2x128xf32>
      %c0_26 = arith.constant 0 : index
      %c0_27 = arith.constant 0 : index
      %46 = vector.load %arg10[%c0_26, %c0_27] : memref<2x128xf32, #tpu.memory_space<vmem>>, vector<2x128xf32>
      tpu.vector_store %arg10[%c0_26, %c0_27], %45 {strides = array<i32>} : memref<2x128xf32, #tpu.memory_space<vmem>>, vector<2x128xf32>,
    } else {
    }
    %c0_i32_2 = arith.constant 0 : i32
    %6 = arith.cmpi eq, %arg2, %c0_i32_2 : i32
    %7 = arith.extui %6 : i1 to i32
    %c0_i32_3 = arith.constant 0 : i32
    %8 = arith.cmpi ne, %7, %c0_i32_3 : i32
    scf.if %8 {
      %c0 = arith.constant 0 : index
      %c0_4 = arith.constant 0 : index
      %9 = vector.load %arg10[%c0, %c0_4] : memref<2x128xf32, #tpu.memory_space<vmem>>, vector<2x128xf32>
      %cst = arith.constant dense<0.000000e+00> : vector<2xf32>
      %10 = vector.multi_reduction <add>, %9, %cst [1] : vector<2x128xf32> to vector<2xf32>
      %11 = vector.shape_cast %10 : vector<2xf32> to vector<2x1xf32>
      %12 = vector.shape_cast %11 : vector<2x1xf32> to vector<1x2x1xf32>
      %c0_5 = arith.constant 0 : index
      %c0_6 = arith.constant 0 : index
      %c0_7 = arith.constant 0 : index
      %13 = vector.load %arg9[%c0_5, %c0_6, %c0_7] : memref<1x2x1xf32, #tpu.memory_space<vmem>>, vector<1x2x1xf32>
      tpu.vector_store %arg9[%c0_5, %c0_6, %c0_7], %12 {strides = array<i32>} : memref<1x2x1xf32, #tpu.memory_space<vmem>>, vector<1x2x1xf32>,
    } else {
    }
    return
  }
  func.func @transform_0(%arg0: i32, %arg1: i32, %arg2: i32) -> (i32, i32, i32) {
    %c0_i32 = arith.constant 0 : i32
    %c0_i32_0 = arith.constant 0 : i32
    return %arg0, %arg1, %c0_i32 : i32, i32, i32
  }
  func.func @transform_1(%arg0: i32, %arg1: i32, %arg2: i32) -> (i32, i32, i32) {
    %c0_i32 = arith.constant 0 : i32
    %c0_i32_0 = arith.constant 0 : i32
    return %arg0, %arg2, %c0_i32 : i32, i32, i32
  }
  func.func @transform_2(%arg0: i32, %arg1: i32, %arg2: i32) -> (i32, i32) {
    %c0_i32 = arith.constant 0 : i32
    return %arg0, %arg1 : i32, i32
  }
  func.func @transform_3(%arg0: i32, %arg1: i32, %arg2: i32) -> (i32, i32) {
    %c0_i32 = arith.constant 0 : i32
    return %arg0, %arg2 : i32, i32
  }
  func.func @transform_4(%arg0: i32, %arg1: i32, %arg2: i32) -> (i32, i32) {
    %c0_i32 = arith.constant 0 : i32
    return %arg0, %arg1 : i32, i32
  }
  func.func @transform_5(%arg0: i32, %arg1: i32, %arg2: i32) -> (i32, i32) {
    %c0_i32 = arith.constant 0 : i32
    return %arg0, %arg2 : i32, i32
  }
  func.func @transform_6(%arg0: i32, %arg1: i32, %arg2: i32) -> (i32, i32, i32) {
    %c0_i32 = arith.constant 0 : i32
    %c0_i32_0 = arith.constant 0 : i32
    return %arg1, %arg0, %c0_i32 : i32, i32, i32
  }
}

</mosaic_0001>

<llo_original>
// kernel: tpu_custom_call.1
$region0: #{tpu_custom_call.1}
  #allocation0 [shape = 'u32[]', space=smem, size = 0x4, offset = 0x4, fixed_abs, tag = 'smem constant byte address 0x4 - core index']
  #allocation1 [shape = 'u32[72,128]{1,0:T(1,128)}', space=vmem, size = 0x9000, scoped, tag = 'internal scratch']
  #allocation2 [shape = 'f32[2,128]{1,0:T(2,128)}', space=vmem, size = 0x400, scoped, tag = 'scratch operand']
  %s0 = inlined_call_operand.vmem [shape: f32[2,128,32], index: 0, kind: input, shape index: {}]
  %s1 = inlined_call_operand.vmem [shape: f32[2,128,32], index: 1, kind: input, shape index: {}]
  %s2 = inlined_call_operand.vmem [shape: f32[2,128], index: 2, kind: input, shape index: {}]
  %s3 = inlined_call_operand.vmem [shape: f32[2,128], index: 3, kind: input, shape index: {}]
  %s4 = inlined_call_operand.vmem [shape: f32[2,128], index: 4, kind: input, shape index: {}]
  %s5 = inlined_call_operand.vmem [shape: f32[2,128], index: 5, kind: input, shape index: {}]
  %s6 = inlined_call_operand.vmem [shape: f32[1,2,1], index: 6, kind: output, shape index: {}]
  %s7 = sld [smem:[#allocation0]]
  $region46: #{tpu_custom_call.1} parent=0
    _
  %s9 = ssub.s32 1, %s7
  %s10 = scalar_select 0, %s9, %s7
  // Predicated region
  $region2: #{tpu_custom_call.1} parent=0 // pred_check
    _
  $region3: #{tpu_custom_call.1} parent=0 // pred_check_branch
    %12 = sbr.rel (0) target = $region5
  $region4: #{tpu_custom_call.1} parent=0 // pred_region
    _
  $region5: #{tpu_custom_call.1} parent=0 // pred_fallthru
    _
  // Predicated region
  $region6: #{tpu_custom_call.1} parent=0 // pred_check
    _
  $region7: #{tpu_custom_call.1} parent=0 // pred_check_branch
    %14 = sbr.rel (0) target = $region9
  $region8: #{tpu_custom_call.1} parent=0 // pred_region
    _
  $region9: #{tpu_custom_call.1} parent=0 // pred_fallthru
    _
  // Predicated region
  $region10: #{tpu_custom_call.1} parent=0 // pred_check
    _
  $region11: #{tpu_custom_call.1} parent=0 // pred_check_branch
    %16 = sbr.rel (0) target = $region13
  $region12: #{tpu_custom_call.1} parent=0 // pred_region
    _
  $region13: #{tpu_custom_call.1} parent=0 // pred_fallthru
    _
  // Predicated region
  $region14: #{tpu_custom_call.1} parent=0 // pred_check
    _
  $region15: #{tpu_custom_call.1} parent=0 // pred_check_branch
    %18 = sbr.rel (0) target = $region17
  $region16: #{tpu_custom_call.1} parent=0 // pred_region
    _
  $region17: #{tpu_custom_call.1} parent=0 // pred_fallthru
    _
  // Predicated region
  $region18: #{tpu_custom_call.1} parent=0 // pred_check
    _
  $region19: #{tpu_custom_call.1} parent=0 // pred_check_branch
    %20 = sbr.rel (0) target = $region21
  $region20: #{tpu_custom_call.1} parent=0 // pred_region
    _
  $region21: #{tpu_custom_call.1} parent=0 // pred_fallthru
    _
  // Predicated region
  $region22: #{tpu_custom_call.1} parent=0 // pred_check
    _
  $region23: #{tpu_custom_call.1} parent=0 // pred_check_branch
    %22 = sbr.rel (0) target = $region25
  $region24: #{tpu_custom_call.1} parent=0 // pred_region
    _
  $region25: #{tpu_custom_call.1} parent=0 // pred_fallthru
    _
  %p23 = scmp.eq.s32.totalorder 0, 0
  // Predicated region
  $region26: #{tpu_custom_call.1} parent=0 // pred_check
    %p24 = pneg %p23
  $region27: #{tpu_custom_call.1} parent=0 // pred_check_branch
    %26 = sbr.rel (%p24) target = $region29
  $region28: #{tpu_custom_call.1} parent=0 // pred_region
    %27 = vst [vmem:[#allocation2] sm:$0x3] 0.0
  $region29: #{tpu_custom_call.1} parent=0 // pred_fallthru
    _
  %p28 = scmp.ge.s32.totalorder 0, 0
  // Predicated region
  $region30: #{tpu_custom_call.1} parent=0 // pred_check
    %p29 = pneg %p28
  $region31: #{tpu_custom_call.1} parent=0 // pred_check_branch
    %31 = sbr.rel (%p29) target = $region33
  $region32: #{tpu_custom_call.1} parent=0 // pred_region
    %v32 = vld [vmem:[%s0] sm:$0xff]
    %v33 = vld [vmem:[%s0 + $0x8] sm:$0xff]
    %v34 = vld [vmem:[%s0 + $0x10] sm:$0xff]
    %v35 = vld [vmem:[%s0 + $0x18] sm:$0xff]
    %v36 = vld [vmem:[%s0 + $0x20] sm:$0xff]
    %v37 = vld [vmem:[%s0 + $0x28] sm:$0xff]
    %v38 = vld [vmem:[%s0 + $0x30] sm:$0xff]
    %v39 = vld [vmem:[%s0 + $0x38] sm:$0xff]
    %v40 = vld [vmem:[%s0 + $0x40] sm:$0xff]
    %v41 = vld [vmem:[%s0 + $0x48] sm:$0xff]
    %v42 = vld [vmem:[%s0 + $0x50] sm:$0xff]
    %v43 = vld [vmem:[%s0 + $0x58] sm:$0xff]
    %v44 = vld [vmem:[%s0 + $0x60] sm:$0xff]
    %v45 = vld [vmem:[%s0 + $0x68] sm:$0xff]
    %v46 = vld [vmem:[%s0 + $0x70] sm:$0xff]
    %v47 = vld [vmem:[%s0 + $0x78] sm:$0xff]
    %v48 = vld [vmem:[%s0 + $0x80] sm:$0xff]
    %v49 = vld [vmem:[%s0 + $0x88] sm:$0xff]
    %v50 = vld [vmem:[%s0 + $0x90] sm:$0xff]
    %v51 = vld [vmem:[%s0 + $0x98] sm:$0xff]
    %v52 = vld [vmem:[%s0 + $0xa0] sm:$0xff]
    %v53 = vld [vmem:[%s0 + $0xa8] sm:$0xff]
    %v54 = vld [vmem:[%s0 + $0xb0] sm:$0xff]
    %v55 = vld [vmem:[%s0 + $0xb8] sm:$0xff]
    %v56 = vld [vmem:[%s0 + $0xc0] sm:$0xff]
    %v57 = vld [vmem:[%s0 + $0xc8] sm:$0xff]
    %v58 = vld [vmem:[%s0 + $0xd0] sm:$0xff]
    %v59 = vld [vmem:[%s0 + $0xd8] sm:$0xff]
    %v60 = vld [vmem:[%s0 + $0xe0] sm:$0xff]
    %v61 = vld [vmem:[%s0 + $0xe8] sm:$0xff]
    %v62 = vld [vmem:[%s0 + $0xf0] sm:$0xff]
    %v63 = vld [vmem:[%s0 + $0xf8] sm:$0xff]
    %v64 = vld [vmem:[%s1] sm:$0xff]
    %v65 = vld [vmem:[%s1 + $0x8] sm:$0xff]
    %v66 = vld [vmem:[%s1 + $0x10] sm:$0xff]
    %v67 = vld [vmem:[%s1 + $0x18] sm:$0xff]
    %v68 = vld [vmem:[%s1 + $0x20] sm:$0xff]
    %v69 = vld [vmem:[%s1 + $0x28] sm:$0xff]
    %v70 = vld [vmem:[%s1 + $0x30] sm:$0xff]
    %v71 = vld [vmem:[%s1 + $0x38] sm:$0xff]
    %v72 = vld [vmem:[%s1 + $0x40] sm:$0xff]
    %v73 = vld [vmem:[%s1 + $0x48] sm:$0xff]
    %v74 = vld [vmem:[%s1 + $0x50] sm:$0xff]
    %v75 = vld [vmem:[%s1 + $0x58] sm:$0xff]
    %v76 = vld [vmem:[%s1 + $0x60] sm:$0xff]
    %v77 = vld [vmem:[%s1 + $0x68] sm:$0xff]
    %v78 = vld [vmem:[%s1 + $0x70] sm:$0xff]
    %v79 = vld [vmem:[%s1 + $0x78] sm:$0xff]
    %v80 = vld [vmem:[%s1 + $0x80] sm:$0xff]
    %v81 = vld [vmem:[%s1 + $0x88] sm:$0xff]
    %v82 = vld [vmem:[%s1 + $0x90] sm:$0xff]
    %v83 = vld [vmem:[%s1 + $0x98] sm:$0xff]
    %v84 = vld [vmem:[%s1 + $0xa0] sm:$0xff]
    %v85 = vld [vmem:[%s1 + $0xa8] sm:$0xff]
    %v86 = vld [vmem:[%s1 + $0xb0] sm:$0xff]
    %v87 = vld [vmem:[%s1 + $0xb8] sm:$0xff]
    %v88 = vld [vmem:[%s1 + $0xc0] sm:$0xff]
    %v89 = vld [vmem:[%s1 + $0xc8] sm:$0xff]
    %v90 = vld [vmem:[%s1 + $0xd0] sm:$0xff]
    %v91 = vld [vmem:[%s1 + $0xd8] sm:$0xff]
    %v92 = vld [vmem:[%s1 + $0xe0] sm:$0xff]
    %v93 = vld [vmem:[%s1 + $0xe8] sm:$0xff]
    %v94 = vld [vmem:[%s1 + $0xf0] sm:$0xff]
    %v95 = vld [vmem:[%s1 + $0xf8] sm:$0xff]
    %v96 = vmul.f32 %v64, -2.0
    %v97 = vmul.f32 %v65, -2.0
    %v98 = vmul.f32 %v66, -2.0
    %v99 = vmul.f32 %v67, -2.0
    %v100 = vmul.f32 %v68, -2.0
    %v101 = vmul.f32 %v69, -2.0
    %v102 = vmul.f32 %v70, -2.0
    %v103 = vmul.f32 %v71, -2.0
    %v104 = vmul.f32 %v72, -2.0
    %v105 = vmul.f32 %v73, -2.0
    %v106 = vmul.f32 %v74, -2.0
    %v107 = vmul.f32 %v75, -2.0
    %v108 = vmul.f32 %v76, -2.0
    %v109 = vmul.f32 %v77, -2.0
    %v110 = vmul.f32 %v78, -2.0
    %v111 = vmul.f32 %v79, -2.0
    %v112 = vmul.f32 %v80, -2.0
    %v113 = vmul.f32 %v81, -2.0
    %v114 = vmul.f32 %v82, -2.0
    %v115 = vmul.f32 %v83, -2.0
    %v116 = vmul.f32 %v84, -2.0
    %v117 = vmul.f32 %v85, -2.0
    %v118 = vmul.f32 %v86, -2.0
    %v119 = vmul.f32 %v87, -2.0
    %v120 = vmul.f32 %v88, -2.0
    %v121 = vmul.f32 %v89, -2.0
    %v122 = vmul.f32 %v90, -2.0
    %v123 = vmul.f32 %v91, -2.0
    %v124 = vmul.f32 %v92, -2.0
    %v125 = vmul.f32 %v93, -2.0
    %v126 = vmul.f32 %v94, -2.0
    %v127 = vmul.f32 %v95, -2.0
    %vm128 = vcmask 261120
    %v130 = vsel %vm128, %v32, 0
    %v133 = vsel %vm128, %v33, 0
    %v136 = vsel %vm128, %v34, 0
    %v139 = vsel %vm128, %v35, 0
    %v142 = vsel %vm128, %v36, 0
    %v145 = vsel %vm128, %v37, 0
    %v148 = vsel %vm128, %v38, 0
    %v151 = vsel %vm128, %v39, 0
    %v154 = vsel %vm128, %v40, 0
    %v157 = vsel %vm128, %v41, 0
    %v160 = vsel %vm128, %v42, 0
    %v163 = vsel %vm128, %v43, 0
    %v166 = vsel %vm128, %v44, 0
    %v169 = vsel %vm128, %v45, 0
    %v172 = vsel %vm128, %v46, 0
    %v175 = vsel %vm128, %v47, 0
    %v178 = vsel %vm128, %v96, 0
    %v181 = vsel %vm128, %v97, 0
    %v184 = vsel %vm128, %v98, 0
    %v187 = vsel %vm128, %v99, 0
    %v190 = vsel %vm128, %v100, 0
    %v193 = vsel %vm128, %v101, 0
    %v196 = vsel %vm128, %v102, 0
    %v199 = vsel %vm128, %v103, 0
    %v202 = vsel %vm128, %v104, 0
    %v205 = vsel %vm128, %v105, 0
    %v208 = vsel %vm128, %v106, 0
    %v211 = vsel %vm128, %v107, 0
    %v214 = vsel %vm128, %v108, 0
    %v217 = vsel %vm128, %v109, 0
    %v220 = vsel %vm128, %v110, 0
    %v223 = vsel %vm128, %v111, 0
    %225 = vmatpush.xpose.msra.mxu0 %v223
    %226 = vmatpush.xpose.msra.mxu0 %v220
    %227 = vmatpush.xpose.msra.mxu0 %v217
    %228 = vmatpush.xpose.msra.mxu0 %v214
    %229 = vmatpush.xpose.msra.mxu0 %v211
    %230 = vmatpush.xpose.msra.mxu0 %v208
    %231 = vmatpush.xpose.msra.mxu0 %v205
    %232 = vmatpush.xpose.msra.mxu0 %v202
    %233 = vmatpush.xpose.msra.mxu0 %v199
    %234 = vmatpush.xpose.msra.mxu0 %v196
    %235 = vmatpush.xpose.msra.mxu0 %v193
    %236 = vmatpush.xpose.msra.mxu0 %v190
    %237 = vmatpush.xpose.msra.mxu0 %v187
    %238 = vmatpush.xpose.msra.mxu0 %v184
    %239 = vmatpush.xpose.msra.mxu0 %v181
    %240 = vmatpush.xpose.msra.mxu0 %v178
    %241 = vmatmul.f32.gmra.mxu0 %v130
    %v242 = vpop.f32.mrf.mxu0
    %v243 = vadd.f32 0.0, %v242
    %244 = vmatmul.f32.gmra.mxu0 %v133
    %v245 = vpop.f32.mrf.mxu0
    %v246 = vadd.f32 0.0, %v245
    %247 = vmatmul.f32.gmra.mxu0 %v136
    %v248 = vpop.f32.mrf.mxu0
    %v249 = vadd.f32 0.0, %v248
    %250 = vmatmul.f32.gmra.mxu0 %v139
    %v251 = vpop.f32.mrf.mxu0
    %v252 = vadd.f32 0.0, %v251
    %253 = vmatmul.f32.gmra.mxu0 %v142
    %v254 = vpop.f32.mrf.mxu0
    %v255 = vadd.f32 0.0, %v254
    %256 = vmatmul.f32.gmra.mxu0 %v145
    %v257 = vpop.f32.mrf.mxu0
    %v258 = vadd.f32 0.0, %v257
    %259 = vmatmul.f32.gmra.mxu0 %v148
    %v260 = vpop.f32.mrf.mxu0
    %v261 = vadd.f32 0.0, %v260
    %262 = vmatmul.f32.gmra.mxu0 %v151
    %v263 = vpop.f32.mrf.mxu0
    %v264 = vadd.f32 0.0, %v263
    %265 = vmatmul.f32.gmra.mxu0 %v154
    %v266 = vpop.f32.mrf.mxu0
    %v267 = vadd.f32 0.0, %v266
    %268 = vmatmul.f32.gmra.mxu0 %v157
    %v269 = vpop.f32.mrf.mxu0
    %v270 = vadd.f32 0.0, %v269
    %271 = vmatmul.f32.gmra.mxu0 %v160
    %v272 = vpop.f32.mrf.mxu0
    %v273 = vadd.f32 0.0, %v272
    %274 = vmatmul.f32.gmra.mxu0 %v163
    %v275 = vpop.f32.mrf.mxu0
    %v276 = vadd.f32 0.0, %v275
    %277 = vmatmul.f32.gmra.mxu0 %v166
    %v278 = vpop.f32.mrf.mxu0
    %v279 = vadd.f32 0.0, %v278
    %280 = vmatmul.f32.gmra.mxu0 %v169
    %v281 = vpop.f32.mrf.mxu0
    %v282 = vadd.f32 0.0, %v281
    %283 = vmatmul.f32.gmra.mxu0 %v172
    %v284 = vpop.f32.mrf.mxu0
    %v285 = vadd.f32 0.0, %v284
    %286 = vmatmul.f32.gmra.mxu0 %v175
    %v287 = vpop.f32.mrf.mxu0
    %v288 = vadd.f32 0.0, %v287
    %289 = vdwg.mxu0
    %v291 = vsel %vm128, %v48, 0
    %v294 = vsel %vm128, %v49, 0
    %v297 = vsel %vm128, %v50, 0
    %v300 = vsel %vm128, %v51, 0
    %v303 = vsel %vm128, %v52, 0
    %v306 = vsel %vm128, %v53, 0
    %v309 = vsel %vm128, %v54, 0
    %v312 = vsel %vm128, %v55, 0
    %v315 = vsel %vm128, %v56, 0
    %v318 = vsel %vm128, %v57, 0
    %v321 = vsel %vm128, %v58, 0
    %v324 = vsel %vm128, %v59, 0
    %v327 = vsel %vm128, %v60, 0
    %v330 = vsel %vm128, %v61, 0
    %v333 = vsel %vm128, %v62, 0
    %v336 = vsel %vm128, %v63, 0
    %v339 = vsel %vm128, %v112, 0
    %v342 = vsel %vm128, %v113, 0
    %v345 = vsel %vm128, %v114, 0
    %v348 = vsel %vm128, %v115, 0
    %v351 = vsel %vm128, %v116, 0
    %v354 = vsel %vm128, %v117, 0
    %v357 = vsel %vm128, %v118, 0
    %v360 = vsel %vm128, %v119, 0
    %v363 = vsel %vm128, %v120, 0
    %v366 = vsel %vm128, %v121, 0
    %v369 = vsel %vm128, %v122, 0
    %v372 = vsel %vm128, %v123, 0
    %v375 = vsel %vm128, %v124, 0
    %v378 = vsel %vm128, %v125, 0
    %v381 = vsel %vm128, %v126, 0
    %v384 = vsel %vm128, %v127, 0
    %386 = vmatpush.xpose.msra.mxu0 %v384
    %387 = vmatpush.xpose.msra.mxu0 %v381
    %388 = vmatpush.xpose.msra.mxu0 %v378
    %389 = vmatpush.xpose.msra.mxu0 %v375
    %390 = vmatpush.xpose.msra.mxu0 %v372
    %391 = vmatpush.xpose.msra.mxu0 %v369
    %392 = vmatpush.xpose.msra.mxu0 %v366
    %393 = vmatpush.xpose.msra.mxu0 %v363
    %394 = vmatpush.xpose.msra.mxu0 %v360
    %395 = vmatpush.xpose.msra.mxu0 %v357
    %396 = vmatpush.xpose.msra.mxu0 %v354
    %397 = vmatpush.xpose.msra.mxu0 %v351
    %398 = vmatpush.xpose.msra.mxu0 %v348
    %399 = vmatpush.xpose.msra.mxu0 %v345
    %400 = vmatpush.xpose.msra.mxu0 %v342
    %401 = vmatpush.xpose.msra.mxu0 %v339
    %402 = vmatmul.f32.gmra.mxu0 %v291
    %v403 = vpop.f32.mrf.mxu0
    %v404 = vadd.f32 0.0, %v403
    %405 = vmatmul.f32.gmra.mxu0 %v294
    %v406 = vpop.f32.mrf.mxu0
    %v407 = vadd.f32 0.0, %v406
    %408 = vmatmul.f32.gmra.mxu0 %v297
    %v409 = vpop.f32.mrf.mxu0
    %v410 = vadd.f32 0.0, %v409
    %411 = vmatmul.f32.gmra.mxu0 %v300
    %v412 = vpop.f32.mrf.mxu0
    %v413 = vadd.f32 0.0, %v412
    %414 = vmatmul.f32.gmra.mxu0 %v303
    %v415 = vpop.f32.mrf.mxu0
    %v416 = vadd.f32 0.0, %v415
    %417 = vmatmul.f32.gmra.mxu0 %v306
    %v418 = vpop.f32.mrf.mxu0
    %v419 = vadd.f32 0.0, %v418
    %420 = vmatmul.f32.gmra.mxu0 %v309
    %v421 = vpop.f32.mrf.mxu0
    %v422 = vadd.f32 0.0, %v421
    %423 = vmatmul.f32.gmra.mxu0 %v312
    %v424 = vpop.f32.mrf.mxu0
    %v425 = vadd.f32 0.0, %v424
    %426 = vmatmul.f32.gmra.mxu0 %v315
    %v427 = vpop.f32.mrf.mxu0
    %v428 = vadd.f32 0.0, %v427
    %429 = vmatmul.f32.gmra.mxu0 %v318
    %v430 = vpop.f32.mrf.mxu0
    %v431 = vadd.f32 0.0, %v430
    %432 = vmatmul.f32.gmra.mxu0 %v321
    %v433 = vpop.f32.mrf.mxu0
    %v434 = vadd.f32 0.0, %v433
    %435 = vmatmul.f32.gmra.mxu0 %v324
    %v436 = vpop.f32.mrf.mxu0
    %v437 = vadd.f32 0.0, %v436
    %438 = vmatmul.f32.gmra.mxu0 %v327
    %v439 = vpop.f32.mrf.mxu0
    %v440 = vadd.f32 0.0, %v439
    %441 = vmatmul.f32.gmra.mxu0 %v330
    %v442 = vpop.f32.mrf.mxu0
    %v443 = vadd.f32 0.0, %v442
    %444 = vmatmul.f32.gmra.mxu0 %v333
    %v445 = vpop.f32.mrf.mxu0
    %v446 = vadd.f32 0.0, %v445
    %447 = vmatmul.f32.gmra.mxu0 %v336
    %v448 = vpop.f32.mrf.mxu0
    %v449 = vadd.f32 0.0, %v448
    %450 = vdwg.mxu0
    %v451 = vld [vmem:[%s4] sm:$0x3]
    %v452 = vperm.slane %v451, 0
    %v453 = vlaneseq
    %v454 = vshrl.u32 %v453, 7
    %456 = vset.pattern.permute.xlu0 %v454
    %457 = vperm.xlu0 %456, %v452
    %v458 = vpop.permute.xlu0 %457
    %v459 = vlaneseq
    %v460 = vshrl.u32 %v459, 7
    %v461 = vadd.s32 %v460, 8
    %462 = vset.pattern.permute.xlu0 %v461
    %463 = vperm.xlu0 %462, %v452
    %v464 = vpop.permute.xlu0 %463
    %v465 = vlaneseq
    %v466 = vshrl.u32 %v465, 7
    %v467 = vadd.s32 %v466, 16
    %468 = vset.pattern.permute.xlu0 %v467
    %469 = vperm.xlu0 %468, %v452
    %v470 = vpop.permute.xlu0 %469
    %v471 = vlaneseq
    %v472 = vshrl.u32 %v471, 7
    %v473 = vadd.s32 %v472, 24
    %474 = vset.pattern.permute.xlu0 %v473
    %475 = vperm.xlu0 %474, %v452
    %v476 = vpop.permute.xlu0 %475
    %v477 = vlaneseq
    %v478 = vshrl.u32 %v477, 7
    %v479 = vadd.s32 %v478, 32
    %480 = vset.pattern.permute.xlu0 %v479
    %481 = vperm.xlu0 %480, %v452
    %v482 = vpop.permute.xlu0 %481
    %v483 = vlaneseq
    %v484 = vshrl.u32 %v483, 7
    %v485 = vadd.s32 %v484, 40
    %486 = vset.pattern.permute.xlu0 %v485
    %487 = vperm.xlu0 %486, %v452
    %v488 = vpop.permute.xlu0 %487
    %v489 = vlaneseq
    %v490 = vshrl.u32 %v489, 7
    %v491 = vadd.s32 %v490, 48
    %492 = vset.pattern.permute.xlu0 %v491
    %493 = vperm.xlu0 %492, %v452
    %v494 = vpop.permute.xlu0 %493
    %v495 = vlaneseq
    %v496 = vshrl.u32 %v495, 7
    %v497 = vadd.s32 %v496, 56
    %498 = vset.pattern.permute.xlu0 %v497
    %499 = vperm.xlu0 %498, %v452
    %v500 = vpop.permute.xlu0 %499
    %v501 = vlaneseq
    %v502 = vshrl.u32 %v501, 7
    %v503 = vadd.s32 %v502, 64
    %504 = vset.pattern.permute.xlu0 %v503
    %505 = vperm.xlu0 %504, %v452
    %v506 = vpop.permute.xlu0 %505
    %v507 = vlaneseq
    %v508 = vshrl.u32 %v507, 7
    %v509 = vadd.s32 %v508, 72
    %510 = vset.pattern.permute.xlu0 %v509
    %511 = vperm.xlu0 %510, %v452
    %v512 = vpop.permute.xlu0 %511
    %v513 = vlaneseq
    %v514 = vshrl.u32 %v513, 7
    %v515 = vadd.s32 %v514, 80
    %516 = vset.pattern.permute.xlu0 %v515
    %517 = vperm.xlu0 %516, %v452
    %v518 = vpop.permute.xlu0 %517
    %v519 = vlaneseq
    %v520 = vshrl.u32 %v519, 7
    %v521 = vadd.s32 %v520, 88
    %522 = vset.pattern.permute.xlu0 %v521
    %523 = vperm.xlu0 %522, %v452
    %v524 = vpop.permute.xlu0 %523
    %v525 = vlaneseq
    %v526 = vshrl.u32 %v525, 7
    %v527 = vadd.s32 %v526, 96
    %528 = vset.pattern.permute.xlu0 %v527
    %529 = vperm.xlu0 %528, %v452
    %v530 = vpop.permute.xlu0 %529
    %v531 = vlaneseq
    %v532 = vshrl.u32 %v531, 7
    %v533 = vadd.s32 %v532, 104
    %534 = vset.pattern.permute.xlu0 %v533
    %535 = vperm.xlu0 %534, %v452
    %v536 = vpop.permute.xlu0 %535
    %v537 = vlaneseq
    %v538 = vshrl.u32 %v537, 7
    %v539 = vadd.s32 %v538, 112
    %540 = vset.pattern.permute.xlu0 %v539
    %541 = vperm.xlu0 %540, %v452
    %v542 = vpop.permute.xlu0 %541
    %v543 = vlaneseq
    %v544 = vshrl.u32 %v543, 7
    %v545 = vadd.s32 %v544, 120
    %546 = vset.pattern.permute.xlu0 %v545
    %547 = vperm.xlu0 %546, %v452
    %v548 = vpop.permute.xlu0 %547
    %v549 = vperm.slane %v451, 1
    %v550 = vlaneseq
    %v551 = vshrl.u32 %v550, 7
    %553 = vset.pattern.permute.xlu0 %v551
    %554 = vperm.xlu0 %553, %v549
    %v555 = vpop.permute.xlu0 %554
    %v556 = vlaneseq
    %v557 = vshrl.u32 %v556, 7
    %v558 = vadd.s32 %v557, 8
    %559 = vset.pattern.permute.xlu0 %v558
    %560 = vperm.xlu0 %559, %v549
    %v561 = vpop.permute.xlu0 %560
    %v562 = vlaneseq
    %v563 = vshrl.u32 %v562, 7
    %v564 = vadd.s32 %v563, 16
    %565 = vset.pattern.permute.xlu0 %v564
    %566 = vperm.xlu0 %565, %v549
    %v567 = vpop.permute.xlu0 %566
    %v568 = vlaneseq
    %v569 = vshrl.u32 %v568, 7
    %v570 = vadd.s32 %v569, 24
    %571 = vset.pattern.permute.xlu0 %v570
    %572 = vperm.xlu0 %571, %v549
    %v573 = vpop.permute.xlu0 %572
    %v574 = vlaneseq
    %v575 = vshrl.u32 %v574, 7
    %v576 = vadd.s32 %v575, 32
    %577 = vset.pattern.permute.xlu0 %v576
    %578 = vperm.xlu0 %577, %v549
    %v579 = vpop.permute.xlu0 %578
    %v580 = vlaneseq
    %v581 = vshrl.u32 %v580, 7
    %v582 = vadd.s32 %v581, 40
    %583 = vset.pattern.permute.xlu0 %v582
    %584 = vperm.xlu0 %583, %v549
    %v585 = vpop.permute.xlu0 %584
    %v586 = vlaneseq
    %v587 = vshrl.u32 %v586, 7
    %v588 = vadd.s32 %v587, 48
    %589 = vset.pattern.permute.xlu0 %v588
    %590 = vperm.xlu0 %589, %v549
    %v591 = vpop.permute.xlu0 %590
    %v592 = vlaneseq
    %v593 = vshrl.u32 %v592, 7
    %v594 = vadd.s32 %v593, 56
    %595 = vset.pattern.permute.xlu0 %v594
    %596 = vperm.xlu0 %595, %v549
    %v597 = vpop.permute.xlu0 %596
    %v598 = vlaneseq
    %v599 = vshrl.u32 %v598, 7
    %v600 = vadd.s32 %v599, 64
    %601 = vset.pattern.permute.xlu0 %v600
    %602 = vperm.xlu0 %601, %v549
    %v603 = vpop.permute.xlu0 %602
    %v604 = vlaneseq
    %v605 = vshrl.u32 %v604, 7
    %v606 = vadd.s32 %v605, 72
    %607 = vset.pattern.permute.xlu0 %v606
    %608 = vperm.xlu0 %607, %v549
    %v609 = vpop.permute.xlu0 %608
    %v610 = vlaneseq
    %v611 = vshrl.u32 %v610, 7
    %v612 = vadd.s32 %v611, 80
    %613 = vset.pattern.permute.xlu0 %v612
    %614 = vperm.xlu0 %613, %v549
    %v615 = vpop.permute.xlu0 %614
    %v616 = vlaneseq
    %v617 = vshrl.u32 %v616, 7
    %v618 = vadd.s32 %v617, 88
    %619 = vset.pattern.permute.xlu0 %v618
    %620 = vperm.xlu0 %619, %v549
    %v621 = vpop.permute.xlu0 %620
    %v622 = vlaneseq
    %v623 = vshrl.u32 %v622, 7
    %v624 = vadd.s32 %v623, 96
    %625 = vset.pattern.permute.xlu0 %v624
    %626 = vperm.xlu0 %625, %v549
    %v627 = vpop.permute.xlu0 %626
    %v628 = vlaneseq
    %v629 = vshrl.u32 %v628, 7
    %v630 = vadd.s32 %v629, 104
    %631 = vset.pattern.permute.xlu0 %v630
    %632 = vperm.xlu0 %631, %v549
    %v633 = vpop.permute.xlu0 %632
    %v634 = vlaneseq
    %v635 = vshrl.u32 %v634, 7
    %v636 = vadd.s32 %v635, 112
    %637 = vset.pattern.permute.xlu0 %v636
    %638 = vperm.xlu0 %637, %v549
    %v639 = vpop.permute.xlu0 %638
    %v640 = vlaneseq
    %v641 = vshrl.u32 %v640, 7
    %v642 = vadd.s32 %v641, 120
    %643 = vset.pattern.permute.xlu0 %v642
    %644 = vperm.xlu0 %643, %v549
    %v645 = vpop.permute.xlu0 %644
    %v646 = vld [vmem:[%s5] sm:$0x3]
    %v648 = vrot.slane %v646, 1
    %v649 = vperm.slane %v646, 0
    %v650 = vperm.slane %v648, 0
    %v653 = vadd.f32 %v458, %v649
    %v654 = vadd.f32 %v464, %v649
    %v655 = vadd.f32 %v470, %v649
    %v656 = vadd.f32 %v476, %v649
    %v657 = vadd.f32 %v482, %v649
    %v658 = vadd.f32 %v488, %v649
    %v659 = vadd.f32 %v494, %v649
    %v660 = vadd.f32 %v500, %v649
    %v661 = vadd.f32 %v506, %v649
    %v662 = vadd.f32 %v512, %v649
    %v663 = vadd.f32 %v518, %v649
    %v664 = vadd.f32 %v524, %v649
    %v665 = vadd.f32 %v530, %v649
    %v666 = vadd.f32 %v536, %v649
    %v667 = vadd.f32 %v542, %v649
    %v668 = vadd.f32 %v548, %v649
    %v669 = vadd.f32 %v555, %v650
    %v670 = vadd.f32 %v561, %v650
    %v671 = vadd.f32 %v567, %v650
    %v672 = vadd.f32 %v573, %v650
    %v673 = vadd.f32 %v579, %v650
    %v674 = vadd.f32 %v585, %v650
    %v675 = vadd.f32 %v591, %v650
    %v676 = vadd.f32 %v597, %v650
    %v677 = vadd.f32 %v603, %v650
    %v678 = vadd.f32 %v609, %v650
    %v679 = vadd.f32 %v615, %v650
    %v680 = vadd.f32 %v621, %v650
    %v681 = vadd.f32 %v627, %v650
    %v682 = vadd.f32 %v633, %v650
    %v683 = vadd.f32 %v639, %v650
    %v684 = vadd.f32 %v645, %v650
    %v685 = vadd.f32 %v653, %v243
    %v686 = vadd.f32 %v654, %v246
    %v687 = vadd.f32 %v655, %v249
    %v688 = vadd.f32 %v656, %v252
    %v689 = vadd.f32 %v657, %v255
    %v690 = vadd.f32 %v658, %v258
    %v691 = vadd.f32 %v659, %v261
    %v692 = vadd.f32 %v660, %v264
    %v693 = vadd.f32 %v661, %v267
    %v694 = vadd.f32 %v662, %v270
    %v695 = vadd.f32 %v663, %v273
    %v696 = vadd.f32 %v664, %v276
    %v697 = vadd.f32 %v665, %v279
    %v698 = vadd.f32 %v666, %v282
    %v699 = vadd.f32 %v667, %v285
    %v700 = vadd.f32 %v668, %v288
    %v701 = vadd.f32 %v669, %v404
    %v702 = vadd.f32 %v670, %v407
    %v703 = vadd.f32 %v671, %v410
    %v704 = vadd.f32 %v672, %v413
    %v705 = vadd.f32 %v673, %v416
    %v706 = vadd.f32 %v674, %v419
    %v707 = vadd.f32 %v675, %v422
    %v708 = vadd.f32 %v676, %v425
    %v709 = vadd.f32 %v677, %v428
    %v710 = vadd.f32 %v678, %v431
    %v711 = vadd.f32 %v679, %v434
    %v712 = vadd.f32 %v680, %v437
    %v713 = vadd.f32 %v681, %v440
    %v714 = vadd.f32 %v682, %v443
    %v715 = vadd.f32 %v683, %v446
    %v716 = vadd.f32 %v684, %v449
    %v717 = vmax.f32 %v685, 0.0
    %v718 = vmax.f32 %v686, 0.0
    %v719 = vmax.f32 %v687, 0.0
    %v720 = vmax.f32 %v688, 0.0
    %v721 = vmax.f32 %v689, 0.0
    %v722 = vmax.f32 %v690, 0.0
    %v723 = vmax.f32 %v691, 0.0
    %v724 = vmax.f32 %v692, 0.0
    %v725 = vmax.f32 %v693, 0.0
    %v726 = vmax.f32 %v694, 0.0
    %v727 = vmax.f32 %v695, 0.0
    %v728 = vmax.f32 %v696, 0.0
    %v729 = vmax.f32 %v697, 0.0
    %v730 = vmax.f32 %v698, 0.0
    %v731 = vmax.f32 %v699, 0.0
    %v732 = vmax.f32 %v700, 0.0
    %v733 = vmax.f32 %v701, 0.0
    %v734 = vmax.f32 %v702, 0.0
    %v735 = vmax.f32 %v703, 0.0
    %v736 = vmax.f32 %v704, 0.0
    %v737 = vmax.f32 %v705, 0.0
    %v738 = vmax.f32 %v706, 0.0
    %v739 = vmax.f32 %v707, 0.0
    %v740 = vmax.f32 %v708, 0.0
    %v741 = vmax.f32 %v709, 0.0
    %v742 = vmax.f32 %v710, 0.0
    %v743 = vmax.f32 %v711, 0.0
    %v744 = vmax.f32 %v712, 0.0
    %v745 = vmax.f32 %v713, 0.0
    %v746 = vmax.f32 %v714, 0.0
    %v747 = vmax.f32 %v715, 0.0
    %v748 = vmax.f32 %v716, 0.0
    %v749 = vrsqrt.pop %v717
    %v750 = vmul.f32 %v749, %v717
    %v751 = vmul.f32 %v750, %v749
    %v752 = vmul.f32 0.5, %v751
    %v753 = vsub.f32 1.5, %v752
    %v754 = vmul.f32 %v749, %v753
    %v755 = vmul.f32 %v717, %v754
    %vm756 = vcmp.eq.f32.partialorder %v717, inf
    %v757 = vsel %vm756, %v717, %v755
    %vm758 = vcmp.eq.f32.partialorder %v717, 0.0
    %v759 = vand.u32 %v717, 2147483648
    %v760 = vsel %vm758, %v759, %v757
    %v761 = vrsqrt.pop %v718
    %v762 = vmul.f32 %v761, %v718
    %v763 = vmul.f32 %v762, %v761
    %v764 = vmul.f32 0.5, %v763
    %v765 = vsub.f32 1.5, %v764
    %v766 = vmul.f32 %v761, %v765
    %v767 = vmul.f32 %v718, %v766
    %vm768 = vcmp.eq.f32.partialorder %v718, inf
    %v769 = vsel %vm768, %v718, %v767
    %vm770 = vcmp.eq.f32.partialorder %v718, 0.0
    %v771 = vand.u32 %v718, 2147483648
    %v772 = vsel %vm770, %v771, %v769
    %v773 = vrsqrt.pop %v719
    %v774 = vmul.f32 %v773, %v719
    %v775 = vmul.f32 %v774, %v773
    %v776 = vmul.f32 0.5, %v775
    %v777 = vsub.f32 1.5, %v776
    %v778 = vmul.f32 %v773, %v777
    %v779 = vmul.f32 %v719, %v778
    %vm780 = vcmp.eq.f32.partialorder %v719, inf
    %v781 = vsel %vm780, %v719, %v779
    %vm782 = vcmp.eq.f32.partialorder %v719, 0.0
    %v783 = vand.u32 %v719, 2147483648
    %v784 = vsel %vm782, %v783, %v781
    %v785 = vrsqrt.pop %v720
    %v786 = vmul.f32 %v785, %v720
    %v787 = vmul.f32 %v786, %v785
    %v788 = vmul.f32 0.5, %v787
    %v789 = vsub.f32 1.5, %v788
    %v790 = vmul.f32 %v785, %v789
    %v791 = vmul.f32 %v720, %v790
    %vm792 = vcmp.eq.f32.partialorder %v720, inf
    %v793 = vsel %vm792, %v720, %v791
    %vm794 = vcmp.eq.f32.partialorder %v720, 0.0
    %v795 = vand.u32 %v720, 2147483648
    %v796 = vsel %vm794, %v795, %v793
    %v797 = vrsqrt.pop %v721
    %v798 = vmul.f32 %v797, %v721
    %v799 = vmul.f32 %v798, %v797
    %v800 = vmul.f32 0.5, %v799
    %v801 = vsub.f32 1.5, %v800
    %v802 = vmul.f32 %v797, %v801
    %v803 = vmul.f32 %v721, %v802
    %vm804 = vcmp.eq.f32.partialorder %v721, inf
    %v805 = vsel %vm804, %v721, %v803
    %vm806 = vcmp.eq.f32.partialorder %v721, 0.0
    %v807 = vand.u32 %v721, 2147483648
    %v808 = vsel %vm806, %v807, %v805
    %v809 = vrsqrt.pop %v722
    %v810 = vmul.f32 %v809, %v722
    %v811 = vmul.f32 %v810, %v809
    %v812 = vmul.f32 0.5, %v811
    %v813 = vsub.f32 1.5, %v812
    %v814 = vmul.f32 %v809, %v813
    %v815 = vmul.f32 %v722, %v814
    %vm816 = vcmp.eq.f32.partialorder %v722, inf
    %v817 = vsel %vm816, %v722, %v815
    %vm818 = vcmp.eq.f32.partialorder %v722, 0.0
    %v819 = vand.u32 %v722, 2147483648
    %v820 = vsel %vm818, %v819, %v817
    %v821 = vrsqrt.pop %v723
    %v822 = vmul.f32 %v821, %v723
    %v823 = vmul.f32 %v822, %v821
    %v824 = vmul.f32 0.5, %v823
    %v825 = vsub.f32 1.5, %v824
    %v826 = vmul.f32 %v821, %v825
    %v827 = vmul.f32 %v723, %v826
    %vm828 = vcmp.eq.f32.partialorder %v723, inf
    %v829 = vsel %vm828, %v723, %v827
    %vm830 = vcmp.eq.f32.partialorder %v723, 0.0
    %v831 = vand.u32 %v723, 2147483648
    %v832 = vsel %vm830, %v831, %v829
    %v833 = vrsqrt.pop %v724
    %v834 = vmul.f32 %v833, %v724
    %v835 = vmul.f32 %v834, %v833
    %v836 = vmul.f32 0.5, %v835
    %v837 = vsub.f32 1.5, %v836
    %v838 = vmul.f32 %v833, %v837
    %v839 = vmul.f32 %v724, %v838
    %vm840 = vcmp.eq.f32.partialorder %v724, inf
    %v841 = vsel %vm840, %v724, %v839
    %vm842 = vcmp.eq.f32.partialorder %v724, 0.0
    %v843 = vand.u32 %v724, 2147483648
    %v844 = vsel %vm842, %v843, %v841
    %v845 = vrsqrt.pop %v725
    %v846 = vmul.f32 %v845, %v725
    %v847 = vmul.f32 %v846, %v845
    %v848 = vmul.f32 0.5, %v847
    %v849 = vsub.f32 1.5, %v848
    %v850 = vmul.f32 %v845, %v849
    %v851 = vmul.f32 %v725, %v850
    %vm852 = vcmp.eq.f32.partialorder %v725, inf
    %v853 = vsel %vm852, %v725, %v851
    %vm854 = vcmp.eq.f32.partialorder %v725, 0.0
    %v855 = vand.u32 %v725, 2147483648
    %v856 = vsel %vm854, %v855, %v853
    %v857 = vrsqrt.pop %v726
    %v858 = vmul.f32 %v857, %v726
    %v859 = vmul.f32 %v858, %v857
    %v860 = vmul.f32 0.5, %v859
    %v861 = vsub.f32 1.5, %v860
    %v862 = vmul.f32 %v857, %v861
    %v863 = vmul.f32 %v726, %v862
    %vm864 = vcmp.eq.f32.partialorder %v726, inf
    %v865 = vsel %vm864, %v726, %v863
    %vm866 = vcmp.eq.f32.partialorder %v726, 0.0
    %v867 = vand.u32 %v726, 2147483648
    %v868 = vsel %vm866, %v867, %v865
    %v869 = vrsqrt.pop %v727
    %v870 = vmul.f32 %v869, %v727
    %v871 = vmul.f32 %v870, %v869
    %v872 = vmul.f32 0.5, %v871
    %v873 = vsub.f32 1.5, %v872
    %v874 = vmul.f32 %v869, %v873
    %v875 = vmul.f32 %v727, %v874
    %vm876 = vcmp.eq.f32.partialorder %v727, inf
    %v877 = vsel %vm876, %v727, %v875
    %vm878 = vcmp.eq.f32.partialorder %v727, 0.0
    %v879 = vand.u32 %v727, 2147483648
    %v880 = vsel %vm878, %v879, %v877
    %v881 = vrsqrt.pop %v728
    %v882 = vmul.f32 %v881, %v728
    %v883 = vmul.f32 %v882, %v881
    %v884 = vmul.f32 0.5, %v883
    %v885 = vsub.f32 1.5, %v884
    %v886 = vmul.f32 %v881, %v885
    %v887 = vmul.f32 %v728, %v886
    %vm888 = vcmp.eq.f32.partialorder %v728, inf
    %v889 = vsel %vm888, %v728, %v887
    %vm890 = vcmp.eq.f32.partialorder %v728, 0.0
    %v891 = vand.u32 %v728, 2147483648
    %v892 = vsel %vm890, %v891, %v889
    %v893 = vrsqrt.pop %v729
    %v894 = vmul.f32 %v893, %v729
    %v895 = vmul.f32 %v894, %v893
    %v896 = vmul.f32 0.5, %v895
    %v897 = vsub.f32 1.5, %v896
    %v898 = vmul.f32 %v893, %v897
    %v899 = vmul.f32 %v729, %v898
    %vm900 = vcmp.eq.f32.partialorder %v729, inf
    %v901 = vsel %vm900, %v729, %v899
    %vm902 = vcmp.eq.f32.partialorder %v729, 0.0
    %v903 = vand.u32 %v729, 2147483648
    %v904 = vsel %vm902, %v903, %v901
    %v905 = vrsqrt.pop %v730
    %v906 = vmul.f32 %v905, %v730
    %v907 = vmul.f32 %v906, %v905
    %v908 = vmul.f32 0.5, %v907
    %v909 = vsub.f32 1.5, %v908
    %v910 = vmul.f32 %v905, %v909
    %v911 = vmul.f32 %v730, %v910
    %vm912 = vcmp.eq.f32.partialorder %v730, inf
    %v913 = vsel %vm912, %v730, %v911
    %vm914 = vcmp.eq.f32.partialorder %v730, 0.0
    %v915 = vand.u32 %v730, 2147483648
    %v916 = vsel %vm914, %v915, %v913
    %v917 = vrsqrt.pop %v731
    %v918 = vmul.f32 %v917, %v731
    %v919 = vmul.f32 %v918, %v917
    %v920 = vmul.f32 0.5, %v919
    %v921 = vsub.f32 1.5, %v920
    %v922 = vmul.f32 %v917, %v921
    %v923 = vmul.f32 %v731, %v922
    %vm924 = vcmp.eq.f32.partialorder %v731, inf
    %v925 = vsel %vm924, %v731, %v923
    %vm926 = vcmp.eq.f32.partialorder %v731, 0.0
    %v927 = vand.u32 %v731, 2147483648
    %v928 = vsel %vm926, %v927, %v925
    %v929 = vrsqrt.pop %v732
    %v930 = vmul.f32 %v929, %v732
    %v931 = vmul.f32 %v930, %v929
    %v932 = vmul.f32 0.5, %v931
    %v933 = vsub.f32 1.5, %v932
    %v934 = vmul.f32 %v929, %v933
    %v935 = vmul.f32 %v732, %v934
    %vm936 = vcmp.eq.f32.partialorder %v732, inf
    %v937 = vsel %vm936, %v732, %v935
    %vm938 = vcmp.eq.f32.partialorder %v732, 0.0
    %v939 = vand.u32 %v732, 2147483648
    %v940 = vsel %vm938, %v939, %v937
    %v941 = vrsqrt.pop %v733
    %v942 = vmul.f32 %v941, %v733
    %v943 = vmul.f32 %v942, %v941
    %v944 = vmul.f32 0.5, %v943
    %v945 = vsub.f32 1.5, %v944
    %v946 = vmul.f32 %v941, %v945
    %v947 = vmul.f32 %v733, %v946
    %vm948 = vcmp.eq.f32.partialorder %v733, inf
    %v949 = vsel %vm948, %v733, %v947
    %vm950 = vcmp.eq.f32.partialorder %v733, 0.0
    %v951 = vand.u32 %v733, 2147483648
    %v952 = vsel %vm950, %v951, %v949
    %v953 = vrsqrt.pop %v734
    %v954 = vmul.f32 %v953, %v734
    %v955 = vmul.f32 %v954, %v953
    %v956 = vmul.f32 0.5, %v955
    %v957 = vsub.f32 1.5, %v956
    %v958 = vmul.f32 %v953, %v957
    %v959 = vmul.f32 %v734, %v958
    %vm960 = vcmp.eq.f32.partialorder %v734, inf
    %v961 = vsel %vm960, %v734, %v959
    %vm962 = vcmp.eq.f32.partialorder %v734, 0.0
    %v963 = vand.u32 %v734, 2147483648
    %v964 = vsel %vm962, %v963, %v961
    %v965 = vrsqrt.pop %v735
    %v966 = vmul.f32 %v965, %v735
    %v967 = vmul.f32 %v966, %v965
    %v968 = vmul.f32 0.5, %v967
    %v969 = vsub.f32 1.5, %v968
    %v970 = vmul.f32 %v965, %v969
    %v971 = vmul.f32 %v735, %v970
    %vm972 = vcmp.eq.f32.partialorder %v735, inf
    %v973 = vsel %vm972, %v735, %v971
    %vm974 = vcmp.eq.f32.partialorder %v735, 0.0
    %v975 = vand.u32 %v735, 2147483648
    %v976 = vsel %vm974, %v975, %v973
    %v977 = vrsqrt.pop %v736
    %v978 = vmul.f32 %v977, %v736
    %v979 = vmul.f32 %v978, %v977
    %v980 = vmul.f32 0.5, %v979
    %v981 = vsub.f32 1.5, %v980
    %v982 = vmul.f32 %v977, %v981
    %v983 = vmul.f32 %v736, %v982
    %vm984 = vcmp.eq.f32.partialorder %v736, inf
    %v985 = vsel %vm984, %v736, %v983
    %vm986 = vcmp.eq.f32.partialorder %v736, 0.0
    %v987 = vand.u32 %v736, 2147483648
    %v988 = vsel %vm986, %v987, %v985
    %v989 = vrsqrt.pop %v737
    %v990 = vmul.f32 %v989, %v737
    %v991 = vmul.f32 %v990, %v989
    %v992 = vmul.f32 0.5, %v991
    %v993 = vsub.f32 1.5, %v992
    %v994 = vmul.f32 %v989, %v993
    %v995 = vmul.f32 %v737, %v994
    %vm996 = vcmp.eq.f32.partialorder %v737, inf
    %v997 = vsel %vm996, %v737, %v995
    %vm998 = vcmp.eq.f32.partialorder %v737, 0.0
    %v999 = vand.u32 %v737, 2147483648
    %v1000 = vsel %vm998, %v999, %v997
    %v1001 = vrsqrt.pop %v738
    %v1002 = vmul.f32 %v1001, %v738
    %v1003 = vmul.f32 %v1002, %v1001
    %v1004 = vmul.f32 0.5, %v1003
    %v1005 = vsub.f32 1.5, %v1004
    %v1006 = vmul.f32 %v1001, %v1005
    %v1007 = vmul.f32 %v738, %v1006
    %vm1008 = vcmp.eq.f32.partialorder %v738, inf
    %v1009 = vsel %vm1008, %v738, %v1007
    %vm1010 = vcmp.eq.f32.partialorder %v738, 0.0
    %v1011 = vand.u32 %v738, 2147483648
    %v1012 = vsel %vm1010, %v1011, %v1009
    %v1013 = vrsqrt.pop %v739
    %v1014 = vmul.f32 %v1013, %v739
    %v1015 = vmul.f32 %v1014, %v1013
    %v1016 = vmul.f32 0.5, %v1015
    %v1017 = vsub.f32 1.5, %v1016
    %v1018 = vmul.f32 %v1013, %v1017
    %v1019 = vmul.f32 %v739, %v1018
    %vm1020 = vcmp.eq.f32.partialorder %v739, inf
    %v1021 = vsel %vm1020, %v739, %v1019
    %vm1022 = vcmp.eq.f32.partialorder %v739, 0.0
    %v1023 = vand.u32 %v739, 2147483648
    %v1024 = vsel %vm1022, %v1023, %v1021
    %v1025 = vrsqrt.pop %v740
    %v1026 = vmul.f32 %v1025, %v740
    %v1027 = vmul.f32 %v1026, %v1025
    %v1028 = vmul.f32 0.5, %v1027
    %v1029 = vsub.f32 1.5, %v1028
    %v1030 = vmul.f32 %v1025, %v1029
    %v1031 = vmul.f32 %v740, %v1030
    %vm1032 = vcmp.eq.f32.partialorder %v740, inf
    %v1033 = vsel %vm1032, %v740, %v1031
    %vm1034 = vcmp.eq.f32.partialorder %v740, 0.0
    %v1035 = vand.u32 %v740, 2147483648
    %v1036 = vsel %vm1034, %v1035, %v1033
    %v1037 = vrsqrt.pop %v741
    %v1038 = vmul.f32 %v1037, %v741
    %v1039 = vmul.f32 %v1038, %v1037
    %v1040 = vmul.f32 0.5, %v1039
    %v1041 = vsub.f32 1.5, %v1040
    %v1042 = vmul.f32 %v1037, %v1041
    %v1043 = vmul.f32 %v741, %v1042
    %vm1044 = vcmp.eq.f32.partialorder %v741, inf
    %v1045 = vsel %vm1044, %v741, %v1043
    %vm1046 = vcmp.eq.f32.partialorder %v741, 0.0
    %v1047 = vand.u32 %v741, 2147483648
    %v1048 = vsel %vm1046, %v1047, %v1045
    %v1049 = vrsqrt.pop %v742
    %v1050 = vmul.f32 %v1049, %v742
    %v1051 = vmul.f32 %v1050, %v1049
    %v1052 = vmul.f32 0.5, %v1051
    %v1053 = vsub.f32 1.5, %v1052
    %v1054 = vmul.f32 %v1049, %v1053
    %v1055 = vmul.f32 %v742, %v1054
    %vm1056 = vcmp.eq.f32.partialorder %v742, inf
    %v1057 = vsel %vm1056, %v742, %v1055
    %vm1058 = vcmp.eq.f32.partialorder %v742, 0.0
    %v1059 = vand.u32 %v742, 2147483648
    %v1060 = vsel %vm1058, %v1059, %v1057
    %v1061 = vrsqrt.pop %v743
    %v1062 = vmul.f32 %v1061, %v743
    %v1063 = vmul.f32 %v1062, %v1061
    %v1064 = vmul.f32 0.5, %v1063
    %v1065 = vsub.f32 1.5, %v1064
    %v1066 = vmul.f32 %v1061, %v1065
    %v1067 = vmul.f32 %v743, %v1066
    %vm1068 = vcmp.eq.f32.partialorder %v743, inf
    %v1069 = vsel %vm1068, %v743, %v1067
    %vm1070 = vcmp.eq.f32.partialorder %v743, 0.0
    %v1071 = vand.u32 %v743, 2147483648
    %v1072 = vsel %vm1070, %v1071, %v1069
    %v1073 = vrsqrt.pop %v744
    %v1074 = vmul.f32 %v1073, %v744
    %v1075 = vmul.f32 %v1074, %v1073
    %v1076 = vmul.f32 0.5, %v1075
    %v1077 = vsub.f32 1.5, %v1076
    %v1078 = vmul.f32 %v1073, %v1077
    %v1079 = vmul.f32 %v744, %v1078
    %vm1080 = vcmp.eq.f32.partialorder %v744, inf
    %v1081 = vsel %vm1080, %v744, %v1079
    %vm1082 = vcmp.eq.f32.partialorder %v744, 0.0
    %v1083 = vand.u32 %v744, 2147483648
    %v1084 = vsel %vm1082, %v1083, %v1081
    %v1085 = vrsqrt.pop %v745
    %v1086 = vmul.f32 %v1085, %v745
    %v1087 = vmul.f32 %v1086, %v1085
    %v1088 = vmul.f32 0.5, %v1087
    %v1089 = vsub.f32 1.5, %v1088
    %v1090 = vmul.f32 %v1085, %v1089
    %v1091 = vmul.f32 %v745, %v1090
    %vm1092 = vcmp.eq.f32.partialorder %v745, inf
    %v1093 = vsel %vm1092, %v745, %v1091
    %vm1094 = vcmp.eq.f32.partialorder %v745, 0.0
    %v1095 = vand.u32 %v745, 2147483648
    %v1096 = vsel %vm1094, %v1095, %v1093
    %v1097 = vrsqrt.pop %v746
    %v1098 = vmul.f32 %v1097, %v746
    %v1099 = vmul.f32 %v1098, %v1097
    %v1100 = vmul.f32 0.5, %v1099
    %v1101 = vsub.f32 1.5, %v1100
    %v1102 = vmul.f32 %v1097, %v1101
    %v1103 = vmul.f32 %v746, %v1102
    %vm1104 = vcmp.eq.f32.partialorder %v746, inf
    %v1105 = vsel %vm1104, %v746, %v1103
    %vm1106 = vcmp.eq.f32.partialorder %v746, 0.0
    %v1107 = vand.u32 %v746, 2147483648
    %v1108 = vsel %vm1106, %v1107, %v1105
    %v1109 = vrsqrt.pop %v747
    %v1110 = vmul.f32 %v1109, %v747
    %v1111 = vmul.f32 %v1110, %v1109
    %v1112 = vmul.f32 0.5, %v1111
    %v1113 = vsub.f32 1.5, %v1112
    %v1114 = vmul.f32 %v1109, %v1113
    %v1115 = vmul.f32 %v747, %v1114
    %vm1116 = vcmp.eq.f32.partialorder %v747, inf
    %v1117 = vsel %vm1116, %v747, %v1115
    %vm1118 = vcmp.eq.f32.partialorder %v747, 0.0
    %v1119 = vand.u32 %v747, 2147483648
    %v1120 = vsel %vm1118, %v1119, %v1117
    %v1121 = vrsqrt.pop %v748
    %v1122 = vmul.f32 %v1121, %v748
    %v1123 = vmul.f32 %v1122, %v1121
    %v1124 = vmul.f32 0.5, %v1123
    %v1125 = vsub.f32 1.5, %v1124
    %v1126 = vmul.f32 %v1121, %v1125
    %v1127 = vmul.f32 %v748, %v1126
    %vm1128 = vcmp.eq.f32.partialorder %v748, inf
    %v1129 = vsel %vm1128, %v748, %v1127
    %vm1130 = vcmp.eq.f32.partialorder %v748, 0.0
    %v1131 = vand.u32 %v748, 2147483648
    %v1132 = vsel %vm1130, %v1131, %v1129
    %v1133 = vsub.f32 1.0, %v760
    %v1134 = vsub.f32 1.0, %v772
    %v1135 = vsub.f32 1.0, %v784
    %v1136 = vsub.f32 1.0, %v796
    %v1137 = vsub.f32 1.0, %v808
    %v1138 = vsub.f32 1.0, %v820
    %v1139 = vsub.f32 1.0, %v832
    %v1140 = vsub.f32 1.0, %v844
    %v1141 = vsub.f32 1.0, %v856
    %v1142 = vsub.f32 1.0, %v868
    %v1143 = vsub.f32 1.0, %v880
    %v1144 = vsub.f32 1.0, %v892
    %v1145 = vsub.f32 1.0, %v904
    %v1146 = vsub.f32 1.0, %v916
    %v1147 = vsub.f32 1.0, %v928
    %v1148 = vsub.f32 1.0, %v940
    %v1149 = vsub.f32 1.0, %v952
    %v1150 = vsub.f32 1.0, %v964
    %v1151 = vsub.f32 1.0, %v976
    %v1152 = vsub.f32 1.0, %v988
    %v1153 = vsub.f32 1.0, %v1000
    %v1154 = vsub.f32 1.0, %v1012
    %v1155 = vsub.f32 1.0, %v1024
    %v1156 = vsub.f32 1.0, %v1036
    %v1157 = vsub.f32 1.0, %v1048
    %v1158 = vsub.f32 1.0, %v1060
    %v1159 = vsub.f32 1.0, %v1072
    %v1160 = vsub.f32 1.0, %v1084
    %v1161 = vsub.f32 1.0, %v1096
    %v1162 = vsub.f32 1.0, %v1108
    %v1163 = vsub.f32 1.0, %v1120
    %v1164 = vsub.f32 1.0, %v1132
    %v1165 = vmax.f32 %v1133, 0.0
    %v1166 = vmax.f32 %v1134, 0.0
    %v1167 = vmax.f32 %v1135, 0.0
    %v1168 = vmax.f32 %v1136, 0.0
    %v1169 = vmax.f32 %v1137, 0.0
    %v1170 = vmax.f32 %v1138, 0.0
    %v1171 = vmax.f32 %v1139, 0.0
    %v1172 = vmax.f32 %v1140, 0.0
    %v1173 = vmax.f32 %v1141, 0.0
    %v1174 = vmax.f32 %v1142, 0.0
    %v1175 = vmax.f32 %v1143, 0.0
    %v1176 = vmax.f32 %v1144, 0.0
    %v1177 = vmax.f32 %v1145, 0.0
    %v1178 = vmax.f32 %v1146, 0.0
    %v1179 = vmax.f32 %v1147, 0.0
    %v1180 = vmax.f32 %v1148, 0.0
    %v1181 = vmax.f32 %v1149, 0.0
    %v1182 = vmax.f32 %v1150, 0.0
    %v1183 = vmax.f32 %v1151, 0.0
    %v1184 = vmax.f32 %v1152, 0.0
    %v1185 = vmax.f32 %v1153, 0.0
    %v1186 = vmax.f32 %v1154, 0.0
    %v1187 = vmax.f32 %v1155, 0.0
    %v1188 = vmax.f32 %v1156, 0.0
    %v1189 = vmax.f32 %v1157, 0.0
    %v1190 = vmax.f32 %v1158, 0.0
    %v1191 = vmax.f32 %v1159, 0.0
    %v1192 = vmax.f32 %v1160, 0.0
    %v1193 = vmax.f32 %v1161, 0.0
    %v1194 = vmax.f32 %v1162, 0.0
    %v1195 = vmax.f32 %v1163, 0.0
    %v1196 = vmax.f32 %v1164, 0.0
    %v1197 = vld [vmem:[%s2] sm:$0x3]
    %v1198 = vperm.slane %v1197, 0
    %v1199 = vlaneseq
    %v1200 = vshrl.u32 %v1199, 7
    %1202 = vset.pattern.permute.xlu0 %v1200
    %1203 = vperm.xlu0 %1202, %v1198
    %v1204 = vpop.permute.xlu0 %1203
    %v1205 = vlaneseq
    %v1206 = vshrl.u32 %v1205, 7
    %v1207 = vadd.s32 %v1206, 8
    %1208 = vset.pattern.permute.xlu0 %v1207
    %1209 = vperm.xlu0 %1208, %v1198
    %v1210 = vpop.permute.xlu0 %1209
    %v1211 = vlaneseq
    %v1212 = vshrl.u32 %v1211, 7
    %v1213 = vadd.s32 %v1212, 16
    %1214 = vset.pattern.permute.xlu0 %v1213
    %1215 = vperm.xlu0 %1214, %v1198
    %v1216 = vpop.permute.xlu0 %1215
    %v1217 = vlaneseq
    %v1218 = vshrl.u32 %v1217, 7
    %v1219 = vadd.s32 %v1218, 24
    %1220 = vset.pattern.permute.xlu0 %v1219
    %1221 = vperm.xlu0 %1220, %v1198
    %v1222 = vpop.permute.xlu0 %1221
    %v1223 = vlaneseq
    %v1224 = vshrl.u32 %v1223, 7
    %v1225 = vadd.s32 %v1224, 32
    %1226 = vset.pattern.permute.xlu0 %v1225
    %1227 = vperm.xlu0 %1226, %v1198
    %v1228 = vpop.permute.xlu0 %1227
    %v1229 = vlaneseq
    %v1230 = vshrl.u32 %v1229, 7
    %v1231 = vadd.s32 %v1230, 40
    %1232 = vset.pattern.permute.xlu0 %v1231
    %1233 = vperm.xlu0 %1232, %v1198
    %v1234 = vpop.permute.xlu0 %1233
    %v1235 = vlaneseq
    %v1236 = vshrl.u32 %v1235, 7
    %v1237 = vadd.s32 %v1236, 48
    %1238 = vset.pattern.permute.xlu0 %v1237
    %1239 = vperm.xlu0 %1238, %v1198
    %v1240 = vpop.permute.xlu0 %1239
    %v1241 = vlaneseq
    %v1242 = vshrl.u32 %v1241, 7
    %v1243 = vadd.s32 %v1242, 56
    %1244 = vset.pattern.permute.xlu0 %v1243
    %1245 = vperm.xlu0 %1244, %v1198
    %v1246 = vpop.permute.xlu0 %1245
    %v1247 = vlaneseq
    %v1248 = vshrl.u32 %v1247, 7
    %v1249 = vadd.s32 %v1248, 64
    %1250 = vset.pattern.permute.xlu0 %v1249
    %1251 = vperm.xlu0 %1250, %v1198
    %v1252 = vpop.permute.xlu0 %1251
    %v1253 = vlaneseq
    %v1254 = vshrl.u32 %v1253, 7
    %v1255 = vadd.s32 %v1254, 72
    %1256 = vset.pattern.permute.xlu0 %v1255
    %1257 = vperm.xlu0 %1256, %v1198
    %v1258 = vpop.permute.xlu0 %1257
    %v1259 = vlaneseq
    %v1260 = vshrl.u32 %v1259, 7
    %v1261 = vadd.s32 %v1260, 80
    %1262 = vset.pattern.permute.xlu0 %v1261
    %1263 = vperm.xlu0 %1262, %v1198
    %v1264 = vpop.permute.xlu0 %1263
    %v1265 = vlaneseq
    %v1266 = vshrl.u32 %v1265, 7
    %v1267 = vadd.s32 %v1266, 88
    %1268 = vset.pattern.permute.xlu0 %v1267
    %1269 = vperm.xlu0 %1268, %v1198
    %v1270 = vpop.permute.xlu0 %1269
    %v1271 = vlaneseq
    %v1272 = vshrl.u32 %v1271, 7
    %v1273 = vadd.s32 %v1272, 96
    %1274 = vset.pattern.permute.xlu0 %v1273
    %1275 = vperm.xlu0 %1274, %v1198
    %v1276 = vpop.permute.xlu0 %1275
    %v1277 = vlaneseq
    %v1278 = vshrl.u32 %v1277, 7
    %v1279 = vadd.s32 %v1278, 104
    %1280 = vset.pattern.permute.xlu0 %v1279
    %1281 = vperm.xlu0 %1280, %v1198
    %v1282 = vpop.permute.xlu0 %1281
    %v1283 = vlaneseq
    %v1284 = vshrl.u32 %v1283, 7
    %v1285 = vadd.s32 %v1284, 112
    %1286 = vset.pattern.permute.xlu0 %v1285
    %1287 = vperm.xlu0 %1286, %v1198
    %v1288 = vpop.permute.xlu0 %1287
    %v1289 = vlaneseq
    %v1290 = vshrl.u32 %v1289, 7
    %v1291 = vadd.s32 %v1290, 120
    %1292 = vset.pattern.permute.xlu0 %v1291
    %1293 = vperm.xlu0 %1292, %v1198
    %v1294 = vpop.permute.xlu0 %1293
    %v1295 = vperm.slane %v1197, 1
    %v1296 = vlaneseq
    %v1297 = vshrl.u32 %v1296, 7
    %1299 = vset.pattern.permute.xlu0 %v1297
    %1300 = vperm.xlu0 %1299, %v1295
    %v1301 = vpop.permute.xlu0 %1300
    %v1302 = vlaneseq
    %v1303 = vshrl.u32 %v1302, 7
    %v1304 = vadd.s32 %v1303, 8
    %1305 = vset.pattern.permute.xlu0 %v1304
    %1306 = vperm.xlu0 %1305, %v1295
    %v1307 = vpop.permute.xlu0 %1306
    %v1308 = vlaneseq
    %v1309 = vshrl.u32 %v1308, 7
    %v1310 = vadd.s32 %v1309, 16
    %1311 = vset.pattern.permute.xlu0 %v1310
    %1312 = vperm.xlu0 %1311, %v1295
    %v1313 = vpop.permute.xlu0 %1312
    %v1314 = vlaneseq
    %v1315 = vshrl.u32 %v1314, 7
    %v1316 = vadd.s32 %v1315, 24
    %1317 = vset.pattern.permute.xlu0 %v1316
    %1318 = vperm.xlu0 %1317, %v1295
    %v1319 = vpop.permute.xlu0 %1318
    %v1320 = vlaneseq
    %v1321 = vshrl.u32 %v1320, 7
    %v1322 = vadd.s32 %v1321, 32
    %1323 = vset.pattern.permute.xlu0 %v1322
    %1324 = vperm.xlu0 %1323, %v1295
    %v1325 = vpop.permute.xlu0 %1324
    %v1326 = vlaneseq
    %v1327 = vshrl.u32 %v1326, 7
    %v1328 = vadd.s32 %v1327, 40
    %1329 = vset.pattern.permute.xlu0 %v1328
    %1330 = vperm.xlu0 %1329, %v1295
    %v1331 = vpop.permute.xlu0 %1330
    %v1332 = vlaneseq
    %v1333 = vshrl.u32 %v1332, 7
    %v1334 = vadd.s32 %v1333, 48
    %1335 = vset.pattern.permute.xlu0 %v1334
    %1336 = vperm.xlu0 %1335, %v1295
    %v1337 = vpop.permute.xlu0 %1336
    %v1338 = vlaneseq
    %v1339 = vshrl.u32 %v1338, 7
    %v1340 = vadd.s32 %v1339, 56
    %1341 = vset.pattern.permute.xlu0 %v1340
    %1342 = vperm.xlu0 %1341, %v1295
    %v1343 = vpop.permute.xlu0 %1342
    %v1344 = vlaneseq
    %v1345 = vshrl.u32 %v1344, 7
    %v1346 = vadd.s32 %v1345, 64
    %1347 = vset.pattern.permute.xlu0 %v1346
    %1348 = vperm.xlu0 %1347, %v1295
    %v1349 = vpop.permute.xlu0 %1348
    %v1350 = vlaneseq
    %v1351 = vshrl.u32 %v1350, 7
    %v1352 = vadd.s32 %v1351, 72
    %1353 = vset.pattern.permute.xlu0 %v1352
    %1354 = vperm.xlu0 %1353, %v1295
    %v1355 = vpop.permute.xlu0 %1354
    %v1356 = vlaneseq
    %v1357 = vshrl.u32 %v1356, 7
    %v1358 = vadd.s32 %v1357, 80
    %1359 = vset.pattern.permute.xlu0 %v1358
    %1360 = vperm.xlu0 %1359, %v1295
    %v1361 = vpop.permute.xlu0 %1360
    %v1362 = vlaneseq
    %v1363 = vshrl.u32 %v1362, 7
    %v1364 = vadd.s32 %v1363, 88
    %1365 = vset.pattern.permute.xlu0 %v1364
    %1366 = vperm.xlu0 %1365, %v1295
    %v1367 = vpop.permute.xlu0 %1366
    %v1368 = vlaneseq
    %v1369 = vshrl.u32 %v1368, 7
    %v1370 = vadd.s32 %v1369, 96
    %1371 = vset.pattern.permute.xlu0 %v1370
    %1372 = vperm.xlu0 %1371, %v1295
    %v1373 = vpop.permute.xlu0 %1372
    %v1374 = vlaneseq
    %v1375 = vshrl.u32 %v1374, 7
    %v1376 = vadd.s32 %v1375, 104
    %1377 = vset.pattern.permute.xlu0 %v1376
    %1378 = vperm.xlu0 %1377, %v1295
    %v1379 = vpop.permute.xlu0 %1378
    %v1380 = vlaneseq
    %v1381 = vshrl.u32 %v1380, 7
    %v1382 = vadd.s32 %v1381, 112
    %1383 = vset.pattern.permute.xlu0 %v1382
    %1384 = vperm.xlu0 %1383, %v1295
    %v1385 = vpop.permute.xlu0 %1384
    %v1386 = vlaneseq
    %v1387 = vshrl.u32 %v1386, 7
    %v1388 = vadd.s32 %v1387, 120
    %1389 = vset.pattern.permute.xlu0 %v1388
    %1390 = vperm.xlu0 %1389, %v1295
    %v1391 = vpop.permute.xlu0 %1390
    %v1392 = vld [vmem:[%s3] sm:$0x3]
    %v1394 = vrot.slane %v1392, 1
    %v1395 = vperm.slane %v1392, 0
    %v1396 = vperm.slane %v1394, 0
    %v1399 = vmul.f32 %v1204, %v1395
    %v1400 = vmul.f32 %v1210, %v1395
    %v1401 = vmul.f32 %v1216, %v1395
    %v1402 = vmul.f32 %v1222, %v1395
    %v1403 = vmul.f32 %v1228, %v1395
    %v1404 = vmul.f32 %v1234, %v1395
    %v1405 = vmul.f32 %v1240, %v1395
    %v1406 = vmul.f32 %v1246, %v1395
    %v1407 = vmul.f32 %v1252, %v1395
    %v1408 = vmul.f32 %v1258, %v1395
    %v1409 = vmul.f32 %v1264, %v1395
    %v1410 = vmul.f32 %v1270, %v1395
    %v1411 = vmul.f32 %v1276, %v1395
    %v1412 = vmul.f32 %v1282, %v1395
    %v1413 = vmul.f32 %v1288, %v1395
    %v1414 = vmul.f32 %v1294, %v1395
    %v1415 = vmul.f32 %v1301, %v1396
    %v1416 = vmul.f32 %v1307, %v1396
    %v1417 = vmul.f32 %v1313, %v1396
    %v1418 = vmul.f32 %v1319, %v1396
    %v1419 = vmul.f32 %v1325, %v1396
    %v1420 = vmul.f32 %v1331, %v1396
    %v1421 = vmul.f32 %v1337, %v1396
    %v1422 = vmul.f32 %v1343, %v1396
    %v1423 = vmul.f32 %v1349, %v1396
    %v1424 = vmul.f32 %v1355, %v1396
    %v1425 = vmul.f32 %v1361, %v1396
    %v1426 = vmul.f32 %v1367, %v1396
    %v1427 = vmul.f32 %v1373, %v1396
    %v1428 = vmul.f32 %v1379, %v1396
    %v1429 = vmul.f32 %v1385, %v1396
    %v1430 = vmul.f32 %v1391, %v1396
    %v1431 = vsub.f32 %v760, %v1165
    %v1432 = vsub.f32 %v772, %v1166
    %v1433 = vsub.f32 %v784, %v1167
    %v1434 = vsub.f32 %v796, %v1168
    %v1435 = vsub.f32 %v808, %v1169
    %v1436 = vsub.f32 %v820, %v1170
    %v1437 = vsub.f32 %v832, %v1171
    %v1438 = vsub.f32 %v844, %v1172
    %v1439 = vsub.f32 %v856, %v1173
    %v1440 = vsub.f32 %v868, %v1174
    %v1441 = vsub.f32 %v880, %v1175
    %v1442 = vsub.f32 %v892, %v1176
    %v1443 = vsub.f32 %v904, %v1177
    %v1444 = vsub.f32 %v916, %v1178
    %v1445 = vsub.f32 %v928, %v1179
    %v1446 = vsub.f32 %v940, %v1180
    %v1447 = vsub.f32 %v952, %v1181
    %v1448 = vsub.f32 %v964, %v1182
    %v1449 = vsub.f32 %v976, %v1183
    %v1450 = vsub.f32 %v988, %v1184
    %v1451 = vsub.f32 %v1000, %v1185
    %v1452 = vsub.f32 %v1012, %v1186
    %v1453 = vsub.f32 %v1024, %v1187
    %v1454 = vsub.f32 %v1036, %v1188
    %v1455 = vsub.f32 %v1048, %v1189
    %v1456 = vsub.f32 %v1060, %v1190
    %v1457 = vsub.f32 %v1072, %v1191
    %v1458 = vsub.f32 %v1084, %v1192
    %v1459 = vsub.f32 %v1096, %v1193
    %v1460 = vsub.f32 %v1108, %v1194
    %v1461 = vsub.f32 %v1120, %v1195
    %v1462 = vsub.f32 %v1132, %v1196
    %v1463 = vmul.f32 %v1399, %v1431
    %v1464 = vmul.f32 %v1400, %v1432
    %v1465 = vmul.f32 %v1401, %v1433
    %v1466 = vmul.f32 %v1402, %v1434
    %v1467 = vmul.f32 %v1403, %v1435
    %v1468 = vmul.f32 %v1404, %v1436
    %v1469 = vmul.f32 %v1405, %v1437
    %v1470 = vmul.f32 %v1406, %v1438
    %v1471 = vmul.f32 %v1407, %v1439
    %v1472 = vmul.f32 %v1408, %v1440
    %v1473 = vmul.f32 %v1409, %v1441
    %v1474 = vmul.f32 %v1410, %v1442
    %v1475 = vmul.f32 %v1411, %v1443
    %v1476 = vmul.f32 %v1412, %v1444
    %v1477 = vmul.f32 %v1413, %v1445
    %v1478 = vmul.f32 %v1414, %v1446
    %v1479 = vmul.f32 %v1415, %v1447
    %v1480 = vmul.f32 %v1416, %v1448
    %v1481 = vmul.f32 %v1417, %v1449
    %v1482 = vmul.f32 %v1418, %v1450
    %v1483 = vmul.f32 %v1419, %v1451
    %v1484 = vmul.f32 %v1420, %v1452
    %v1485 = vmul.f32 %v1421, %v1453
    %v1486 = vmul.f32 %v1422, %v1454
    %v1487 = vmul.f32 %v1423, %v1455
    %v1488 = vmul.f32 %v1424, %v1456
    %v1489 = vmul.f32 %v1425, %v1457
    %v1490 = vmul.f32 %v1426, %v1458
    %v1491 = vmul.f32 %v1427, %v1459
    %v1492 = vmul.f32 %v1428, %v1460
    %v1493 = vmul.f32 %v1429, %v1461
    %v1494 = vmul.f32 %v1430, %v1462
    %v1495 = vadd.f32 %v1165, %v1463
    %v1496 = vadd.f32 %v1166, %v1464
    %v1497 = vadd.f32 %v1167, %v1465
    %v1498 = vadd.f32 %v1168, %v1466
    %v1499 = vadd.f32 %v1169, %v1467
    %v1500 = vadd.f32 %v1170, %v1468
    %v1501 = vadd.f32 %v1171, %v1469
    %v1502 = vadd.f32 %v1172, %v1470
    %v1503 = vadd.f32 %v1173, %v1471
    %v1504 = vadd.f32 %v1174, %v1472
    %v1505 = vadd.f32 %v1175, %v1473
    %v1506 = vadd.f32 %v1176, %v1474
    %v1507 = vadd.f32 %v1177, %v1475
    %v1508 = vadd.f32 %v1178, %v1476
    %v1509 = vadd.f32 %v1179, %v1477
    %v1510 = vadd.f32 %v1180, %v1478
    %v1511 = vadd.f32 %v1181, %v1479
    %v1512 = vadd.f32 %v1182, %v1480
    %v1513 = vadd.f32 %v1183, %v1481
    %v1514 = vadd.f32 %v1184, %v1482
    %v1515 = vadd.f32 %v1185, %v1483
    %v1516 = vadd.f32 %v1186, %v1484
    %v1517 = vadd.f32 %v1187, %v1485
    %v1518 = vadd.f32 %v1188, %v1486
    %v1519 = vadd.f32 %v1189, %v1487
    %v1520 = vadd.f32 %v1190, %v1488
    %v1521 = vadd.f32 %v1191, %v1489
    %v1522 = vadd.f32 %v1192, %v1490
    %v1523 = vadd.f32 %v1193, %v1491
    %v1524 = vadd.f32 %v1194, %v1492
    %v1525 = vadd.f32 %v1195, %v1493
    %v1526 = vadd.f32 %v1196, %v1494
    %p1527 = scmp.eq.s32.totalorder 0, 0
    %s1528 = scalar_select %p1527, 1.0, 2.0
    %v1529 = vld [vmem:[#allocation2] sm:$0x3]
    %1530 = vadd.xlane.f32.xlu0 %v1495
    %v1531 = vpop.xlane.xlu0 %1530
    %1532 = vadd.xlane.f32.xlu0 %v1496
    %v1533 = vpop.xlane.xlu0 %1532
    %1534 = vadd.xlane.f32.xlu0 %v1497
    %v1535 = vpop.xlane.xlu0 %1534
    %1536 = vadd.xlane.f32.xlu0 %v1498
    %v1537 = vpop.xlane.xlu0 %1536
    %1538 = vadd.xlane.f32.xlu0 %v1499
    %v1539 = vpop.xlane.xlu0 %1538
    %1540 = vadd.xlane.f32.xlu0 %v1500
    %v1541 = vpop.xlane.xlu0 %1540
    %1542 = vadd.xlane.f32.xlu0 %v1501
    %v1543 = vpop.xlane.xlu0 %1542
    %1544 = vadd.xlane.f32.xlu0 %v1502
    %v1545 = vpop.xlane.xlu0 %1544
    %1546 = vadd.xlane.f32.xlu0 %v1503
    %v1547 = vpop.xlane.xlu0 %1546
    %1548 = vadd.xlane.f32.xlu0 %v1504
    %v1549 = vpop.xlane.xlu0 %1548
    %1550 = vadd.xlane.f32.xlu0 %v1505
    %v1551 = vpop.xlane.xlu0 %1550
    %1552 = vadd.xlane.f32.xlu0 %v1506
    %v1553 = vpop.xlane.xlu0 %1552
    %1554 = vadd.xlane.f32.xlu0 %v1507
    %v1555 = vpop.xlane.xlu0 %1554
    %1556 = vadd.xlane.f32.xlu0 %v1508
    %v1557 = vpop.xlane.xlu0 %1556
    %1558 = vadd.xlane.f32.xlu0 %v1509
    %v1559 = vpop.xlane.xlu0 %1558
    %1560 = vadd.xlane.f32.xlu0 %v1510
    %v1561 = vpop.xlane.xlu0 %1560
    %1562 = vadd.xlane.f32.xlu0 %v1511
    %v1563 = vpop.xlane.xlu0 %1562
    %1564 = vadd.xlane.f32.xlu0 %v1512
    %v1565 = vpop.xlane.xlu0 %1564
    %1566 = vadd.xlane.f32.xlu0 %v1513
    %v1567 = vpop.xlane.xlu0 %1566
    %1568 = vadd.xlane.f32.xlu0 %v1514
    %v1569 = vpop.xlane.xlu0 %1568
    %1570 = vadd.xlane.f32.xlu0 %v1515
    %v1571 = vpop.xlane.xlu0 %1570
    %1572 = vadd.xlane.f32.xlu0 %v1516
    %v1573 = vpop.xlane.xlu0 %1572
    %1574 = vadd.xlane.f32.xlu0 %v1517
    %v1575 = vpop.xlane.xlu0 %1574
    %1576 = vadd.xlane.f32.xlu0 %v1518
    %v1577 = vpop.xlane.xlu0 %1576
    %1578 = vadd.xlane.f32.xlu0 %v1519
    %v1579 = vpop.xlane.xlu0 %1578
    %1580 = vadd.xlane.f32.xlu0 %v1520
    %v1581 = vpop.xlane.xlu0 %1580
    %1582 = vadd.xlane.f32.xlu0 %v1521
    %v1583 = vpop.xlane.xlu0 %1582
    %1584 = vadd.xlane.f32.xlu0 %v1522
    %v1585 = vpop.xlane.xlu0 %1584
    %1586 = vadd.xlane.f32.xlu0 %v1523
    %v1587 = vpop.xlane.xlu0 %1586
    %1588 = vadd.xlane.f32.xlu0 %v1524
    %v1589 = vpop.xlane.xlu0 %1588
    %1590 = vadd.xlane.f32.xlu0 %v1525
    %v1591 = vpop.xlane.xlu0 %1590
    %1592 = vadd.xlane.f32.xlu0 %v1526
    %v1593 = vpop.xlane.xlu0 %1592
    %v1594 = vstv %s1528
    %v1595 = vmul.f32 %v1594, %v1531
    %v1596 = vmul.f32 %v1594, %v1533
    %v1597 = vmul.f32 %v1594, %v1535
    %v1598 = vmul.f32 %v1594, %v1537
    %v1599 = vmul.f32 %v1594, %v1539
    %v1600 = vmul.f32 %v1594, %v1541
    %v1601 = vmul.f32 %v1594, %v1543
    %v1602 = vmul.f32 %v1594, %v1545
    %v1603 = vmul.f32 %v1594, %v1547
    %v1604 = vmul.f32 %v1594, %v1549
    %v1605 = vmul.f32 %v1594, %v1551
    %v1606 = vmul.f32 %v1594, %v1553
    %v1607 = vmul.f32 %v1594, %v1555
    %v1608 = vmul.f32 %v1594, %v1557
    %v1609 = vmul.f32 %v1594, %v1559
    %v1610 = vmul.f32 %v1594, %v1561
    %v1611 = vmul.f32 %v1594, %v1563
    %v1612 = vmul.f32 %v1594, %v1565
    %v1613 = vmul.f32 %v1594, %v1567
    %v1614 = vmul.f32 %v1594, %v1569
    %v1615 = vmul.f32 %v1594, %v1571
    %v1616 = vmul.f32 %v1594, %v1573
    %v1617 = vmul.f32 %v1594, %v1575
    %v1618 = vmul.f32 %v1594, %v1577
    %v1619 = vmul.f32 %v1594, %v1579
    %v1620 = vmul.f32 %v1594, %v1581
    %v1621 = vmul.f32 %v1594, %v1583
    %v1622 = vmul.f32 %v1594, %v1585
    %v1623 = vmul.f32 %v1594, %v1587
    %v1624 = vmul.f32 %v1594, %v1589
    %v1625 = vmul.f32 %v1594, %v1591
    %v1626 = vmul.f32 %v1594, %v1593
    %v1659 = vlaneseq
    %v1660 = vand.u32 %v1659, 127
    %v1661 = vperm.slane %v1595, %v1660
    %v1662 = vadd.s32 %v1660, 4294967288
    %v1663 = vperm.slane %v1596, %v1662
    %vm1664 = vcmask 130112
    %v1665 = vsel %vm1664, %v1663, %v1661
    %v1666 = vadd.s32 %v1660, 4294967280
    %v1667 = vperm.slane %v1597, %v1666
    %vm1668 = vcmask 195712
    %v1669 = vsel %vm1668, %v1667, %v1665
    %v1670 = vadd.s32 %v1660, 4294967272
    %v1671 = vperm.slane %v1598, %v1670
    %vm1672 = vcmask 261312
    %v1673 = vsel %vm1672, %v1671, %v1669
    %v1674 = vadd.s32 %v1660, 4294967264
    %v1675 = vperm.slane %v1599, %v1674
    %vm1676 = vcmask 326912
    %v1677 = vsel %vm1676, %v1675, %v1673
    %v1678 = vadd.s32 %v1660, 4294967256
    %v1679 = vperm.slane %v1600, %v1678
    %vm1680 = vcmask 392512
    %v1681 = vsel %vm1680, %v1679, %v1677
    %v1682 = vadd.s32 %v1660, 4294967248
    %v1683 = vperm.slane %v1601, %v1682
    %vm1684 = vcmask 458112
    %v1685 = vsel %vm1684, %v1683, %v1681
    %v1686 = vadd.s32 %v1660, 4294967240
    %v1687 = vperm.slane %v1602, %v1686
    %vm1688 = vcmask 523712
    %v1689 = vsel %vm1688, %v1687, %v1685
    %v1690 = vadd.s32 %v1660, 4294967232
    %v1691 = vperm.slane %v1603, %v1690
    %vm1692 = vcmask 589312
    %v1693 = vsel %vm1692, %v1691, %v1689
    %v1694 = vadd.s32 %v1660, 4294967224
    %v1695 = vperm.slane %v1604, %v1694
    %vm1696 = vcmask 654912
    %v1697 = vsel %vm1696, %v1695, %v1693
    %v1698 = vadd.s32 %v1660, 4294967216
    %v1699 = vperm.slane %v1605, %v1698
    %vm1700 = vcmask 720512
    %v1701 = vsel %vm1700, %v1699, %v1697
    %v1702 = vadd.s32 %v1660, 4294967208
    %v1703 = vperm.slane %v1606, %v1702
    %vm1704 = vcmask 786112
    %v1705 = vsel %vm1704, %v1703, %v1701
    %v1706 = vadd.s32 %v1660, 4294967200
    %v1707 = vperm.slane %v1607, %v1706
    %vm1708 = vcmask 851712
    %v1709 = vsel %vm1708, %v1707, %v1705
    %v1710 = vadd.s32 %v1660, 4294967192
    %v1711 = vperm.slane %v1608, %v1710
    %vm1712 = vcmask 917312
    %v1713 = vsel %vm1712, %v1711, %v1709
    %v1714 = vadd.s32 %v1660, 4294967184
    %v1715 = vperm.slane %v1609, %v1714
    %vm1716 = vcmask 982912
    %v1717 = vsel %vm1716, %v1715, %v1713
    %v1718 = vadd.s32 %v1660, 4294967176
    %v1719 = vperm.slane %v1610, %v1718
    %vm1720 = vcmask 1048512
    %v1721 = vsel %vm1720, %v1719, %v1717
    %v1722 = vperm.slane %v1611, %v1660
    %v1723 = vperm.slane %v1612, %v1662
    %v1724 = vsel %vm1664, %v1723, %v1722
    %v1725 = vperm.slane %v1613, %v1666
    %v1726 = vsel %vm1668, %v1725, %v1724
    %v1727 = vperm.slane %v1614, %v1670
    %v1728 = vsel %vm1672, %v1727, %v1726
    %v1729 = vperm.slane %v1615, %v1674
    %v1730 = vsel %vm1676, %v1729, %v1728
    %v1731 = vperm.slane %v1616, %v1678
    %v1732 = vsel %vm1680, %v1731, %v1730
    %v1733 = vperm.slane %v1617, %v1682
    %v1734 = vsel %vm1684, %v1733, %v1732
    %v1735 = vperm.slane %v1618, %v1686
    %v1736 = vsel %vm1688, %v1735, %v1734
    %v1737 = vperm.slane %v1619, %v1690
    %v1738 = vsel %vm1692, %v1737, %v1736
    %v1739 = vperm.slane %v1620, %v1694
    %v1740 = vsel %vm1696, %v1739, %v1738
    %v1741 = vperm.slane %v1621, %v1698
    %v1742 = vsel %vm1700, %v1741, %v1740
    %v1743 = vperm.slane %v1622, %v1702
    %v1744 = vsel %vm1704, %v1743, %v1742
    %v1745 = vperm.slane %v1623, %v1706
    %v1746 = vsel %vm1708, %v1745, %v1744
    %v1747 = vperm.slane %v1624, %v1710
    %v1748 = vsel %vm1712, %v1747, %v1746
    %v1749 = vperm.slane %v1625, %v1714
    %v1750 = vsel %vm1716, %v1749, %v1748
    %v1751 = vperm.slane %v1626, %v1718
    %v1752 = vsel %vm1720, %v1751, %v1750
    %vm1753 = vcmask 1041409
    %v1754 = vsel %vm1753, %v1752, %v1721
    %v1756 = vadd.f32 %v1529, %v1754
    %1757 = vst [vmem:[#allocation2] sm:$0x3] %v1756
  $region33: #{tpu_custom_call.1} parent=0 // pred_fallthru
    _
  // Predicated region
  $region34: #{tpu_custom_call.1} parent=0 // pred_check
    %p1758 = pneg %p23
  $region35: #{tpu_custom_call.1} parent=0 // pred_check_branch
    %1760 = sbr.rel (%p1758) target = $region37
  $region36: #{tpu_custom_call.1} parent=0 // pred_region
    %v1761 = vld [vmem:[#allocation2] sm:$0x3]
    %vm1762 = vcmask 1041408
    %v1763 = vsel %vm1762, %v1761, 0.0
    %1764 = vadd.xlane.f32.xlu0 %v1763
    %v1765 = vpop.xlane.xlu0 %1764
    %vm1766 = vcmask 1024
    %1767 = vst.msk [vmem:[%s6] sm:$0x3] %vm1766, %v1765
  $region37: #{tpu_custom_call.1} parent=0 // pred_fallthru
    _
  // Predicated region
  $region38: #{tpu_custom_call.1} parent=0 // pred_check
    _
  $region39: #{tpu_custom_call.1} parent=0 // pred_check_branch
    %1769 = sbr.rel (0) target = $region41
  $region40: #{tpu_custom_call.1} parent=0 // pred_region
    _
  $region41: #{tpu_custom_call.1} parent=0 // pred_fallthru
    _
  // Predicated region
  $region42: #{tpu_custom_call.1} parent=0 // pred_check
    _
  $region43: #{tpu_custom_call.1} parent=0 // pred_check_branch
    %1771 = sbr.rel (0) target = $region45
  $region44: #{tpu_custom_call.1} parent=0 // pred_region
    _
  $region45: #{tpu_custom_call.1} parent=0 // pred_fallthru
    _

</llo_original>
